<compile_context>
chip_gen: v7x
topology: tpu7x:2x2x1
jax: 0.10.0
libtpu: 0.0.40
codegen_flags: <defaults>
</compile_context>

<pallas_src>
import functools
import math

import jax
import jax.numpy as jnp
from jax import lax
from jax.experimental import pallas as pl
from jax.experimental.pallas import tpu as pltpu


def _layernorm(v, g, b, eps=1e-5):
    # v: (R, E) f32, g/b: (1, E).  Matches torch.nn.LayerNorm over last dim.
    mu = jnp.mean(v, axis=-1, keepdims=True)
    var = jnp.mean((v - mu) ** 2, axis=-1, keepdims=True)
    return (v - mu) * lax.rsqrt(var + eps) * g + b


def _residual_block_kernel(
    x_ref,                         # (Nb, L, E)  bf16, one batch block
    ln1_g_ref, ln1_b_ref,          # (1, E) f32
    w_qkv_ref, b_qkv_ref,          # (E, 3E) bf16, (1, 3E) f32   (pre-transposed)
    w_out_ref, b_out_ref,          # (E, E)  bf16, (1, E)  f32
    ln2_g_ref, ln2_b_ref,          # (1, E) f32
    w_fc_ref, b_fc_ref,            # (E, 4E) bf16, (1, 4E) f32
    w_pr_ref, b_pr_ref,            # (4E, E) bf16, (1, E)  f32
    o_ref,                         # (Nb, L, E)  bf16
    qkv_ref,                       # scratch VMEM (Nb*L, 3E) bf16
    *, n_head: int, mlp_chunk: int,
):
    nb, L, E = x_ref.shape
    H = n_head
    dh = E // H
    rows = nb * L
    scale = 1.0 / math.sqrt(dh)
    bf16, f32 = jnp.bfloat16, jnp.float32

    x = x_ref[...].astype(f32).reshape(rows, E)                # (rows, E) f32

    # ---- self-attention on ln_1(x) -----------------------------------------
    h = _layernorm(x, ln1_g_ref[...], ln1_b_ref[...])
    qkv = jnp.dot(h.astype(bf16), w_qkv_ref[...],
                  preferred_element_type=f32) + b_qkv_ref[...]
    # Stage the projection once in VMEM (lane-dense bf16 store); the f32 value
    # is dead right after, keeping vreg pressure low.
    qkv_ref[...] = qkv.astype(bf16)

    def head_major(col0):
        # (rows, E) -> (nb*H, L, dh).  Transpose in f32, downcast for the MXU.
        t = qkv_ref[:, col0:col0 + E].astype(f32)
        t = jnp.transpose(t.reshape(nb, L, H, dh), (0, 2, 1, 3))
        return t.reshape(nb * H, L, dh).astype(bf16)

    qh = head_major(0)
    kh = head_major(E)
    vh = head_major(2 * E)

    # One batched matmul over all (batch, head) pairs.
    s = jnp.einsum('bqd,bkd->bqk', qh, kh,
                   preferred_element_type=f32) * scale          # (nb*H, L, L)
    s = s - jnp.max(s, axis=-1, keepdims=True)
    p = jnp.exp(s)
    p = p * pl.reciprocal(jnp.sum(p, axis=-1, keepdims=True), approx=True)
    ctx = jnp.einsum('bqk,bkd->bqd', p.astype(bf16), vh,
                     preferred_element_type=f32)                # (nb*H, L, dh)
    # Repack once to a lane-dense (rows, E) slab (f32 transpose), no scratch.
    ctx = jnp.transpose(ctx.reshape(nb, H, L, dh), (0, 2, 1, 3)).reshape(rows, E)

    attn = jnp.dot(ctx.astype(bf16), w_out_ref[...],
                   preferred_element_type=f32) + b_out_ref[...]
    x1 = x + attn                                               # first residual

    # ---- MLP on ln_2(x1): hidden dim processed in lane chunks ---------------
    h2 = _layernorm(x1, ln2_g_ref[...], ln2_b_ref[...]).astype(bf16)
    hidden = w_fc_ref.shape[1]
    m = jnp.zeros((rows, E), f32)
    for c in range(hidden // mlp_chunk):
        lo = c * mlp_chunk
        f = jnp.dot(h2, w_fc_ref[:, lo:lo + mlp_chunk],
                    preferred_element_type=f32) + b_fc_ref[:, lo:lo + mlp_chunk]
        f = f * jax.nn.sigmoid(1.702 * f)                       # QuickGELU (f32)
        m = m + jnp.dot(f.astype(bf16), w_pr_ref[lo:lo + mlp_chunk, :],
                        preferred_element_type=f32)
    m = m + b_pr_ref[...]

    o_ref[...] = (x1 + m).reshape(nb, L, E).astype(o_ref.dtype)  # 2nd residual


def _pick_mlp_chunk(hidden):
    for c in (1024, 512, 256, 128):
        if hidden >= c and hidden % c == 0:
            return c
    return hidden


def _act_vmem_bytes(nb, L, E, H, chunk):
    """Generous accounting of per-block activation VMEM (bytes)."""
    rows = nb * L
    b = 0
    b += 2 * (2 * rows * E * 2)                 # in + out blocks, double-buffered, bf16
    b += rows * 3 * E * 2                       # qkv scratch (bf16)
    b += rows * 3 * E * 4                       # f32 qkv / head-major temporaries
    b += 3 * rows * E * 2                       # head-major q/k/v (bf16)
    b += 2 * nb * H * L * L * 4                 # scores + probs (f32)
    b += nb * H * L * L * 2                     # probs (bf16 operand)
    b += 4 * rows * E * 4                       # x, x1, h/h2/ctx, m (f32 working set)
    b += rows * chunk * 4 + rows * chunk * 2    # MLP hidden chunk (f32 + bf16)
    return b


def residual_attention_block(x_lne, params, *, d_model, n_head,
                             block_batch=None):
    """x_lne: (L, N, E) like PyTorch.  Returns (L, N, E) in x_lne.dtype."""
    L, N, E = x_lne.shape
    assert E == d_model
    assert E % n_head == 0, "d_model must be divisible by n_head"
    H = n_head

    x_nle = jnp.transpose(x_lne, (1, 0, 2)).astype(jnp.bfloat16)  # (N, L, E) bf16

    bf16 = jnp.bfloat16
    # Pre-transpose / pre-cast weights ONCE on the wrapper (HBM) side so the
    # kernel consumes them in MXU-native layout as bf16.
    weights = [
        params["ln1_g"].astype(jnp.float32), params["ln1_b"].astype(jnp.float32),
        jnp.asarray(params["w_qkv"].T, bf16), params["b_qkv"].astype(jnp.float32),
        jnp.asarray(params["w_out"].T, bf16), params["b_out"].astype(jnp.float32),
        params["ln2_g"].astype(jnp.float32), params["ln2_b"].astype(jnp.float32),
        jnp.asarray(params["w_fc"].T, bf16), params["b_fc"].astype(jnp.float32),
        jnp.asarray(params["w_pr"].T, bf16), params["b_pr"].astype(jnp.float32),
    ]
    weight_bytes = sum(int(w.size) * w.dtype.itemsize for w in weights)

    mlp_chunk = _pick_mlp_chunk(4 * E)

    # Physical VMEM capacity (v5e/v6e: 128 MiB, v7x: 64 MiB per TC).
    vmem_cap = 64 << 20
    try:
        info = pltpu.get_tpu_info()
        vmem_cap = int(getattr(info, "vmem_capacity_bytes", vmem_cap))
    except Exception:
        pass
    headroom = 8 << 20

    # Batch elements per grid step: target ~512 matmul rows on 128 MiB parts,
    # ~256 on 64 MiB parts; then shrink until the VMEM budget fits.
    if block_batch is None:
        target_rows = 256 if vmem_cap <= (64 << 20) else 512
        block_batch = max(1, min(64, target_rows // max(L, 1)))
    nb = max(1, min(block_batch, N))
    while nb > 1 and weight_bytes + _act_vmem_bytes(nb, L, E, H, mlp_chunk) \
            > vmem_cap - headroom:
        nb = max(1, nb // 2)
    # Expose >= 2 parallel grid blocks so both v7x TensorCores get work.
    if N >= 2 and -(-N // nb) < 2:
        nb = -(-N // 2)

    n_blocks = -(-N // nb)
    N_pad = n_blocks * nb
    if N_pad != N:
        x_nle = jnp.pad(x_nle, ((0, N_pad - N), (0, 0), (0, 0)))

    # Weights / biases: whole-array VMEM residents, not double-buffered.
    vmem_spec = pl.BlockSpec(memory_space=pltpu.MemorySpace.VMEM)

    need = weight_bytes + _act_vmem_bytes(nb, L, E, H, mlp_chunk) + (8 << 20)
    vmem_limit = int(min(max(need, 32 << 20), vmem_cap - (2 << 20)))

    kernel = functools.partial(_residual_block_kernel,
                               n_head=n_head, mlp_chunk=mlp_chunk)

    out_nle = pl.pallas_call(
        kernel,
        out_shape=jax.ShapeDtypeStruct((N_pad, L, E), jnp.bfloat16),
        grid=(n_blocks,),
        in_specs=[pl.BlockSpec((nb, L, E), lambda i: (i, 0, 0))]
                 + [vmem_spec] * len(weights),
        out_specs=pl.BlockSpec((nb, L, E), lambda i: (i, 0, 0)),
        scratch_shapes=[pltpu.VMEM((nb * L, 3 * E), jnp.bfloat16)],
        compiler_params=pltpu.CompilerParams(
            dimension_semantics=("parallel",),
            vmem_limit_bytes=vmem_limit),
    )(x_nle, *weights)

    out_nle = out_nle[:N]
    return jnp.transpose(out_nle, (1, 0, 2)).astype(x_lne.dtype)  # (L, N, E)


# ------------------------- pure-JAX reference (f32) --------------------------
def reference_block(x_lne, params, *, d_model, n_head):
    E, H = d_model, n_head
    dh = E // H

    def ln(v, g, b):
        mu = jnp.mean(v, -1, keepdims=True)
        var = jnp.mean((v - mu) ** 2, -1, keepdims=True)
        return (v - mu) / jnp.sqrt(var + 1e-5) * g + b

    x = jnp.transpose(x_lne, (1, 0, 2))                        # (N, L, E)
    h = ln(x, params["ln1_g"], params["ln1_b"])
    qkv = jnp.einsum("nle,fe->nlf", h, params["w_qkv"]) + params["b_qkv"]
    q, k, v = jnp.split(qkv, 3, axis=-1)
    N, L, _ = q.shape

    def heads(t):
        return jnp.transpose(t.reshape(N, L, H, dh), (0, 2, 1, 3))
    qh, kh, vh = heads(q), heads(k), heads(v)
    s = jnp.einsum("nhld,nhmd->nhlm", qh, kh) / math.sqrt(dh)
    p = jax.nn.softmax(s, axis=-1)
    ctx = jnp.einsum("nhlm,nhmd->nhld", p, vh)
    ctx = jnp.transpose(ctx, (0, 2, 1, 3)).reshape(N, L, E)
    attn = jnp.einsum("nle,fe->nlf", ctx, params["w_out"]) + params["b_out"]
    x1 = x + attn
    h2 = ln(x1, params["ln2_g"], params["ln2_b"])
    f = jnp.einsum("nle,fe->nlf", h2, params["w_fc"]) + params["b_fc"]
    f = f * jax.nn.sigmoid(1.702 * f)
    m = jnp.einsum("nlf,ef->nle", f, params["w_pr"]) + params["b_pr"]
    return jnp.transpose(x1 + m, (1, 0, 2))


if __name__ == "__main__":
    d_model, n_head = 32, 4
    L, N = 8, 2

    key = jax.random.PRNGKey(0)
    ks = jax.random.split(key, 8)

    # Deterministic synthetic parameters (shapes follow the PyTorch module).
    params = {
        "ln1_g": jnp.ones((1, d_model), jnp.float32),
        "ln1_b": jnp.zeros((1, d_model), jnp.float32),
        "w_qkv": jax.random.normal(ks[0], (3 * d_model, d_model), jnp.float32) * 0.1,
        "b_qkv": jax.random.normal(ks[1], (1, 3 * d_model), jnp.float32) * 0.01,
        "w_out": jax.random.normal(ks[2], (d_model, d_model), jnp.float32) * 0.1,
        "b_out": jnp.zeros((1, d_model), jnp.float32),
        "ln2_g": jnp.ones((1, d_model), jnp.float32),
        "ln2_b": jnp.zeros((1, d_model), jnp.float32),
        "w_fc":  jax.random.normal(ks[3], (4 * d_model, d_model), jnp.float32) * 0.1,
        "b_fc":  jnp.zeros((1, 4 * d_model), jnp.float32),
        "w_pr":  jax.random.normal(ks[4], (d_model, 4 * d_model), jnp.float32) * 0.1,
        "b_pr":  jnp.zeros((1, d_model), jnp.float32),
    }

    x = jax.random.normal(ks[5], (L, N, d_model), jnp.float32)

    out = residual_attention_block(x, params, d_model=d_model, n_head=n_head)
    out = jax.block_until_ready(out)

    ref = reference_block(x, params, d_model=d_model, n_head=n_head)
    assert out.shape == (L, N, d_model)
    # kernel uses bf16 activations / MXU operands (f32 accumulation) -> drift
    assert jnp.allclose(out.astype(jnp.float32), ref, atol=5e-2, rtol=5e-2), \
        "mismatch vs reference"

    print("KERNEL_OK")
</pallas_src>

<mosaic_0001>
module attributes {stable_mosaic.version = 11 : i64} {
  func.func @_residual_block_kernel(%arg0: i32, %arg1: memref<1x8x32xbf16, #tpu.memory_space<vmem>>, %arg2: memref<1x32xf32, #tpu.memory_space<vmem>>, %arg3: memref<1x32xf32, #tpu.memory_space<vmem>>, %arg4: memref<32x96xbf16, #tpu.memory_space<vmem>>, %arg5: memref<1x96xf32, #tpu.memory_space<vmem>>, %arg6: memref<32x32xbf16, #tpu.memory_space<vmem>>, %arg7: memref<1x32xf32, #tpu.memory_space<vmem>>, %arg8: memref<1x32xf32, #tpu.memory_space<vmem>>, %arg9: memref<1x32xf32, #tpu.memory_space<vmem>>, %arg10: memref<32x128xbf16, #tpu.memory_space<vmem>>, %arg11: memref<1x128xf32, #tpu.memory_space<vmem>>, %arg12: memref<128x32xbf16, #tpu.memory_space<vmem>>, %arg13: memref<1x32xf32, #tpu.memory_space<vmem>>, %arg14: memref<1x8x32xbf16, #tpu.memory_space<vmem>>, %arg15: memref<8x96xbf16, #tpu.memory_space<vmem>>) attributes {dimension_semantics = [#tpu.dimension_semantics<parallel>], iteration_bounds = array<i64: 2>, scalar_prefetch = 0 : i64, scratch_operands = 1 : i64, tpu.core_type = #tpu.core_type<tc>, window_params = [{transform_indices = @transform_0, window_bounds = array<i64: 1, 8, 32>}, {pipeline_mode = #tpu.pipeline_mode<synchronous>, transform_indices = @transform_1, window_bounds = array<i64: 1, 32>}, {pipeline_mode = #tpu.pipeline_mode<synchronous>, transform_indices = @transform_2, window_bounds = array<i64: 1, 32>}, {pipeline_mode = #tpu.pipeline_mode<synchronous>, transform_indices = @transform_3, window_bounds = array<i64: 32, 96>}, {pipeline_mode = #tpu.pipeline_mode<synchronous>, transform_indices = @transform_4, window_bounds = array<i64: 1, 96>}, {pipeline_mode = #tpu.pipeline_mode<synchronous>, transform_indices = @transform_5, window_bounds = array<i64: 32, 32>}, {pipeline_mode = #tpu.pipeline_mode<synchronous>, transform_indices = @transform_6, window_bounds = array<i64: 1, 32>}, {pipeline_mode = #tpu.pipeline_mode<synchronous>, transform_indices = @transform_7, window_bounds = array<i64: 1, 32>}, {pipeline_mode = #tpu.pipeline_mode<synchronous>, transform_indices = @transform_8, window_bounds = array<i64: 1, 32>}, {pipeline_mode = #tpu.pipeline_mode<synchronous>, transform_indices = @transform_9, window_bounds = array<i64: 32, 128>}, {pipeline_mode = #tpu.pipeline_mode<synchronous>, transform_indices = @transform_10, window_bounds = array<i64: 1, 128>}, {pipeline_mode = #tpu.pipeline_mode<synchronous>, transform_indices = @transform_11, window_bounds = array<i64: 128, 32>}, {pipeline_mode = #tpu.pipeline_mode<synchronous>, transform_indices = @transform_12, window_bounds = array<i64: 1, 32>}, {transform_indices = @transform_13, window_bounds = array<i64: 1, 8, 32>}]} {
    %c0 = arith.constant 0 : index
    %c0_0 = arith.constant 0 : index
    %c0_1 = arith.constant 0 : index
    %0 = vector.load %arg1[%c0, %c0_0, %c0_1] : memref<1x8x32xbf16, #tpu.memory_space<vmem>>, vector<1x8x32xbf16>
    %1 = arith.extf %0 : vector<1x8x32xbf16> to vector<1x8x32xf32>
    %2 = vector.shape_cast %1 : vector<1x8x32xf32> to vector<8x32xf32>
    %c0_2 = arith.constant 0 : index
    %c0_3 = arith.constant 0 : index
    %3 = vector.load %arg2[%c0_2, %c0_3] : memref<1x32xf32, #tpu.memory_space<vmem>>, vector<1x32xf32>
    %c0_4 = arith.constant 0 : index
    %c0_5 = arith.constant 0 : index
    %4 = vector.load %arg3[%c0_4, %c0_5] : memref<1x32xf32, #tpu.memory_space<vmem>>, vector<1x32xf32>
    %cst = arith.constant dense<0.000000e+00> : vector<8xf32>
    %5 = vector.multi_reduction <add>, %2, %cst [1] : vector<8x32xf32> to vector<8xf32>
    %6 = vector.shape_cast %5 : vector<8xf32> to vector<8x1xf32>
    %cst_6 = arith.constant 3.200000e+01 : f32
    %7 = vector.broadcast %cst_6 : f32 to vector<8x1xf32>
    %8 = arith.divf %6, %7 : vector<8x1xf32>
    %9 = vector.broadcast %8 : vector<8x1xf32> to vector<8x32xf32>
    %10 = arith.subf %2, %9 : vector<8x32xf32>
    %11 = arith.mulf %10, %10 : vector<8x32xf32>
    %cst_7 = arith.constant dense<0.000000e+00> : vector<8xf32>
    %12 = vector.multi_reduction <add>, %11, %cst_7 [1] : vector<8x32xf32> to vector<8xf32>
    %13 = vector.shape_cast %12 : vector<8xf32> to vector<8x1xf32>
    %cst_8 = arith.constant 3.200000e+01 : f32
    %14 = vector.broadcast %cst_8 : f32 to vector<8x1xf32>
    %15 = arith.divf %13, %14 : vector<8x1xf32>
    %16 = vector.broadcast %8 : vector<8x1xf32> to vector<8x32xf32>
    %17 = arith.subf %2, %16 : vector<8x32xf32>
    %cst_9 = arith.constant 9.99999974E-6 : f32
    %18 = vector.broadcast %cst_9 : f32 to vector<8x1xf32>
    %19 = arith.addf %15, %18 : vector<8x1xf32>
    %20 = math.rsqrt %19 : vector<8x1xf32>
    %21 = vector.broadcast %20 : vector<8x1xf32> to vector<8x32xf32>
    %22 = arith.mulf %17, %21 : vector<8x32xf32>
    %23 = vector.broadcast %3 : vector<1x32xf32> to vector<8x32xf32>
    %24 = arith.mulf %22, %23 : vector<8x32xf32>
    %25 = vector.broadcast %4 : vector<1x32xf32> to vector<8x32xf32>
    %26 = arith.addf %24, %25 : vector<8x32xf32>
    %27 = arith.truncf %26 : vector<8x32xf32> to vector<8x32xbf16>
    %c0_10 = arith.constant 0 : index
    %c0_11 = arith.constant 0 : index
    %28 = vector.load %arg4[%c0_10, %c0_11] : memref<32x96xbf16, #tpu.memory_space<vmem>>, vector<32x96xbf16>
    %cst_12 = arith.constant dense<0.000000e+00> : vector<8x96xf32>
    %29 = tpu.matmul %27, %28, %cst_12 {dimension_numbers = #tpu.dot_dimension_numbers<[1], [0], [0], [1], [0, 0, 1, 1], [], []>} : vector<8x32xbf16>, vector<32x96xbf16>, vector<8x96xf32> -> vector<8x96xf32>
    %c0_13 = arith.constant 0 : index
    %c0_14 = arith.constant 0 : index
    %30 = vector.load %arg5[%c0_13, %c0_14] : memref<1x96xf32, #tpu.memory_space<vmem>>, vector<1x96xf32>
    %31 = vector.broadcast %30 : vector<1x96xf32> to vector<8x96xf32>
    %32 = arith.addf %29, %31 : vector<8x96xf32>
    %33 = arith.truncf %32 : vector<8x96xf32> to vector<8x96xbf16>
    %c0_15 = arith.constant 0 : index
    %c0_16 = arith.constant 0 : index
    %34 = vector.load %arg15[%c0_15, %c0_16] : memref<8x96xbf16, #tpu.memory_space<vmem>>, vector<8x96xbf16>
    tpu.vector_store %arg15[%c0_15, %c0_16], %33 {strides = array<i32>} : memref<8x96xbf16, #tpu.memory_space<vmem>>, vector<8x96xbf16>,
    %c0_17 = arith.constant 0 : index
    %c0_18 = arith.constant 0 : index
    %35 = vector.load %arg15[%c0_17, %c0_18] : memref<8x96xbf16, #tpu.memory_space<vmem>>, vector<8x32xbf16>
    %36 = arith.extf %35 : vector<8x32xbf16> to vector<8x32xf32>
    %37 = vector.shape_cast %36 : vector<8x32xf32> to vector<1x8x4x8xf32>
    %38 = tpu.transpose %37, [0, 2, 1, 3] : vector<1x8x4x8xf32> -> vector<1x4x8x8xf32>
    %39 = vector.shape_cast %38 : vector<1x4x8x8xf32> to vector<4x8x8xf32>
    %40 = arith.truncf %39 : vector<4x8x8xf32> to vector<4x8x8xbf16>
    %c0_19 = arith.constant 0 : index
    %c32 = arith.constant 32 : index
    %41 = vector.load %arg15[%c0_19, %c32] : memref<8x96xbf16, #tpu.memory_space<vmem>>, vector<8x32xbf16>
    %42 = arith.extf %41 : vector<8x32xbf16> to vector<8x32xf32>
    %43 = vector.shape_cast %42 : vector<8x32xf32> to vector<1x8x4x8xf32>
    %44 = tpu.transpose %43, [0, 2, 1, 3] : vector<1x8x4x8xf32> -> vector<1x4x8x8xf32>
    %45 = vector.shape_cast %44 : vector<1x4x8x8xf32> to vector<4x8x8xf32>
    %46 = arith.truncf %45 : vector<4x8x8xf32> to vector<4x8x8xbf16>
    %c0_20 = arith.constant 0 : index
    %c64 = arith.constant 64 : index
    %47 = vector.load %arg15[%c0_20, %c64] : memref<8x96xbf16, #tpu.memory_space<vmem>>, vector<8x32xbf16>
    %48 = arith.extf %47 : vector<8x32xbf16> to vector<8x32xf32>
    %49 = vector.shape_cast %48 : vector<8x32xf32> to vector<1x8x4x8xf32>
    %50 = tpu.transpose %49, [0, 2, 1, 3] : vector<1x8x4x8xf32> -> vector<1x4x8x8xf32>
    %51 = vector.shape_cast %50 : vector<1x4x8x8xf32> to vector<4x8x8xf32>
    %52 = arith.truncf %51 : vector<4x8x8xf32> to vector<4x8x8xbf16>
    "tpu.trace_start"() <{level = 10 : i32, message = "bqd,bkd->bqk"}> : () -> ()
    %cst_21 = arith.constant dense<0.000000e+00> : vector<4x8x8xf32>
    %53 = tpu.matmul %40, %46, %cst_21 {dimension_numbers = #tpu.dot_dimension_numbers<[2], [2], [1], [1], [0, 0, 0, 1, 1, 1], [0], [0]>} : vector<4x8x8xbf16>, vector<4x8x8xbf16>, vector<4x8x8xf32> -> vector<4x8x8xf32>
    "tpu.trace_stop"() : () -> ()
    %cst_22 = arith.constant 0.353553385 : f32
    %54 = vector.broadcast %cst_22 : f32 to vector<4x8x8xf32>
    %55 = arith.mulf %53, %54 : vector<4x8x8xf32>
    %cst_23 = arith.constant dense<0xFF800000> : vector<4x8xf32>
    %56 = vector.multi_reduction <maximumf>, %55, %cst_23 [2] : vector<4x8x8xf32> to vector<4x8xf32>
    %57 = vector.shape_cast %56 : vector<4x8xf32> to vector<4x8x1xf32>
    %58 = vector.broadcast %57 : vector<4x8x1xf32> to vector<4x8x8xf32>
    %59 = arith.subf %55, %58 : vector<4x8x8xf32>
    %60 = math.exp %59 : vector<4x8x8xf32>
    %cst_24 = arith.constant dense<0.000000e+00> : vector<4x8xf32>
    %61 = vector.multi_reduction <add>, %60, %cst_24 [2] : vector<4x8x8xf32> to vector<4x8xf32>
    %62 = vector.shape_cast %61 : vector<4x8xf32> to vector<4x8x1xf32>
    %63 = tpu.reciprocal %62 {approx = true} : vector<4x8x1xf32> -> vector<4x8x1xf32>
    %64 = vector.broadcast %63 : vector<4x8x1xf32> to vector<4x8x8xf32>
    %65 = arith.mulf %60, %64 : vector<4x8x8xf32>
    %66 = arith.truncf %65 : vector<4x8x8xf32> to vector<4x8x8xbf16>
    "tpu.trace_start"() <{level = 10 : i32, message = "bqk,bkd->bqd"}> : () -> ()
    %cst_25 = arith.constant dense<0.000000e+00> : vector<4x8x8xf32>
    %67 = tpu.matmul %66, %52, %cst_25 {dimension_numbers = #tpu.dot_dimension_numbers<[2], [1], [1], [2], [0, 0, 0, 1, 1, 2], [0], [0]>} : vector<4x8x8xbf16>, vector<4x8x8xbf16>, vector<4x8x8xf32> -> vector<4x8x8xf32>
    "tpu.trace_stop"() : () -> ()
    %68 = vector.shape_cast %67 : vector<4x8x8xf32> to vector<1x4x8x8xf32>
    %69 = tpu.transpose %68, [0, 2, 1, 3] : vector<1x4x8x8xf32> -> vector<1x8x4x8xf32>
    %70 = vector.shape_cast %69 : vector<1x8x4x8xf32> to vector<8x32xf32>
    %71 = arith.truncf %70 : vector<8x32xf32> to vector<8x32xbf16>
    %c0_26 = arith.constant 0 : index
    %c0_27 = arith.constant 0 : index
    %72 = vector.load %arg6[%c0_26, %c0_27] : memref<32x32xbf16, #tpu.memory_space<vmem>>, vector<32x32xbf16>
    %cst_28 = arith.constant dense<0.000000e+00> : vector<8x32xf32>
    %73 = tpu.matmul %71, %72, %cst_28 {dimension_numbers = #tpu.dot_dimension_numbers<[1], [0], [0], [1], [0, 0, 1, 1], [], []>} : vector<8x32xbf16>, vector<32x32xbf16>, vector<8x32xf32> -> vector<8x32xf32>
    %c0_29 = arith.constant 0 : index
    %c0_30 = arith.constant 0 : index
    %74 = vector.load %arg7[%c0_29, %c0_30] : memref<1x32xf32, #tpu.memory_space<vmem>>, vector<1x32xf32>
    %75 = vector.broadcast %74 : vector<1x32xf32> to vector<8x32xf32>
    %76 = arith.addf %73, %75 : vector<8x32xf32>
    %77 = arith.addf %2, %76 : vector<8x32xf32>
    %c0_31 = arith.constant 0 : index
    %c0_32 = arith.constant 0 : index
    %78 = vector.load %arg8[%c0_31, %c0_32] : memref<1x32xf32, #tpu.memory_space<vmem>>, vector<1x32xf32>
    %c0_33 = arith.constant 0 : index
    %c0_34 = arith.constant 0 : index
    %79 = vector.load %arg9[%c0_33, %c0_34] : memref<1x32xf32, #tpu.memory_space<vmem>>, vector<1x32xf32>
    %cst_35 = arith.constant dense<0.000000e+00> : vector<8xf32>
    %80 = vector.multi_reduction <add>, %77, %cst_35 [1] : vector<8x32xf32> to vector<8xf32>
    %81 = vector.shape_cast %80 : vector<8xf32> to vector<8x1xf32>
    %cst_36 = arith.constant 3.200000e+01 : f32
    %82 = vector.broadcast %cst_36 : f32 to vector<8x1xf32>
    %83 = arith.divf %81, %82 : vector<8x1xf32>
    %84 = vector.broadcast %83 : vector<8x1xf32> to vector<8x32xf32>
    %85 = arith.subf %77, %84 : vector<8x32xf32>
    %86 = arith.mulf %85, %85 : vector<8x32xf32>
    %cst_37 = arith.constant dense<0.000000e+00> : vector<8xf32>
    %87 = vector.multi_reduction <add>, %86, %cst_37 [1] : vector<8x32xf32> to vector<8xf32>
    %88 = vector.shape_cast %87 : vector<8xf32> to vector<8x1xf32>
    %cst_38 = arith.constant 3.200000e+01 : f32
    %89 = vector.broadcast %cst_38 : f32 to vector<8x1xf32>
    %90 = arith.divf %88, %89 : vector<8x1xf32>
    %91 = vector.broadcast %83 : vector<8x1xf32> to vector<8x32xf32>
    %92 = arith.subf %77, %91 : vector<8x32xf32>
    %cst_39 = arith.constant 9.99999974E-6 : f32
    %93 = vector.broadcast %cst_39 : f32 to vector<8x1xf32>
    %94 = arith.addf %90, %93 : vector<8x1xf32>
    %95 = math.rsqrt %94 : vector<8x1xf32>
    %96 = vector.broadcast %95 : vector<8x1xf32> to vector<8x32xf32>
    %97 = arith.mulf %92, %96 : vector<8x32xf32>
    %98 = vector.broadcast %78 : vector<1x32xf32> to vector<8x32xf32>
    %99 = arith.mulf %97, %98 : vector<8x32xf32>
    %100 = vector.broadcast %79 : vector<1x32xf32> to vector<8x32xf32>
    %101 = arith.addf %99, %100 : vector<8x32xf32>
    %102 = arith.truncf %101 : vector<8x32xf32> to vector<8x32xbf16>
    %cst_40 = arith.constant 0.000000e+00 : f32
    %103 = vector.broadcast %cst_40 : f32 to vector<8x32xf32>
    %c0_41 = arith.constant 0 : index
    %c0_42 = arith.constant 0 : index
    %104 = vector.load %arg10[%c0_41, %c0_42] : memref<32x128xbf16, #tpu.memory_space<vmem>>, vector<32x128xbf16>
    %cst_43 = arith.constant dense<0.000000e+00> : vector<8x128xf32>
    %105 = tpu.matmul %102, %104, %cst_43 {dimension_numbers = #tpu.dot_dimension_numbers<[1], [0], [0], [1], [0, 0, 1, 1], [], []>} : vector<8x32xbf16>, vector<32x128xbf16>, vector<8x128xf32> -> vector<8x128xf32>
    %c0_44 = arith.constant 0 : index
    %c0_45 = arith.constant 0 : index
    %106 = vector.load %arg11[%c0_44, %c0_45] : memref<1x128xf32, #tpu.memory_space<vmem>>, vector<1x128xf32>
    %107 = vector.broadcast %106 : vector<1x128xf32> to vector<8x128xf32>
    %108 = arith.addf %105, %107 : vector<8x128xf32>
    %cst_46 = arith.constant 1.702000e+00 : f32
    %109 = vector.broadcast %cst_46 : f32 to vector<8x128xf32>
    %110 = arith.mulf %109, %108 : vector<8x128xf32>
    %111 = arith.negf %110 : vector<8x128xf32>
    %112 = math.exp %111 : vector<8x128xf32>
    %cst_47 = arith.constant 1.000000e+00 : f32
    %113 = vector.broadcast %cst_47 : f32 to vector<8x128xf32>
    %114 = arith.addf %113, %112 : vector<8x128xf32>
    %115 = arith.divf %113, %114 : vector<8x128xf32>
    %116 = arith.mulf %108, %115 : vector<8x128xf32>
    %117 = arith.truncf %116 : vector<8x128xf32> to vector<8x128xbf16>
    %c0_48 = arith.constant 0 : index
    %c0_49 = arith.constant 0 : index
    %118 = vector.load %arg12[%c0_48, %c0_49] : memref<128x32xbf16, #tpu.memory_space<vmem>>, vector<128x32xbf16>
    %cst_50 = arith.constant dense<0.000000e+00> : vector<8x32xf32>
    %119 = tpu.matmul %117, %118, %cst_50 {dimension_numbers = #tpu.dot_dimension_numbers<[1], [0], [0], [1], [0, 0, 1, 1], [], []>} : vector<8x128xbf16>, vector<128x32xbf16>, vector<8x32xf32> -> vector<8x32xf32>
    %120 = arith.addf %103, %119 : vector<8x32xf32>
    %c0_51 = arith.constant 0 : index
    %c0_52 = arith.constant 0 : index
    %121 = vector.load %arg13[%c0_51, %c0_52] : memref<1x32xf32, #tpu.memory_space<vmem>>, vector<1x32xf32>
    %122 = vector.broadcast %121 : vector<1x32xf32> to vector<8x32xf32>
    %123 = arith.addf %120, %122 : vector<8x32xf32>
    %124 = arith.addf %77, %123 : vector<8x32xf32>
    %125 = vector.shape_cast %124 : vector<8x32xf32> to vector<1x8x32xf32>
    %126 = arith.truncf %125 : vector<1x8x32xf32> to vector<1x8x32xbf16>
    %c0_53 = arith.constant 0 : index
    %c0_54 = arith.constant 0 : index
    %c0_55 = arith.constant 0 : index
    %127 = vector.load %arg14[%c0_53, %c0_54, %c0_55] : memref<1x8x32xbf16, #tpu.memory_space<vmem>>, vector<1x8x32xbf16>
    tpu.vector_store %arg14[%c0_53, %c0_54, %c0_55], %126 {strides = array<i32>} : memref<1x8x32xbf16, #tpu.memory_space<vmem>>, vector<1x8x32xbf16>,
    return
  }
  func.func @transform_0(%arg0: i32) -> (i32, i32, i32) {
    %c0_i32 = arith.constant 0 : i32
    %c0_i32_0 = arith.constant 0 : i32
    %c0_i32_1 = arith.constant 0 : i32
    return %arg0, %c0_i32, %c0_i32_0 : i32, i32, i32
  }
  func.func @transform_1(%arg0: i32) -> (i32, i32) {
    %c0_i32 = arith.constant 0 : i32
    %c0_i32_0 = arith.constant 0 : i32
    %c0_i32_1 = arith.constant 0 : i32
    return %c0_i32, %c0_i32_0 : i32, i32
  }
  func.func @transform_2(%arg0: i32) -> (i32, i32) {
    %c0_i32 = arith.constant 0 : i32
    %c0_i32_0 = arith.constant 0 : i32
    %c0_i32_1 = arith.constant 0 : i32
    return %c0_i32, %c0_i32_0 : i32, i32
  }
  func.func @transform_3(%arg0: i32) -> (i32, i32) {
    %c0_i32 = arith.constant 0 : i32
    %c0_i32_0 = arith.constant 0 : i32
    %c0_i32_1 = arith.constant 0 : i32
    return %c0_i32, %c0_i32_0 : i32, i32
  }
  func.func @transform_4(%arg0: i32) -> (i32, i32) {
    %c0_i32 = arith.constant 0 : i32
    %c0_i32_0 = arith.constant 0 : i32
    %c0_i32_1 = arith.constant 0 : i32
    return %c0_i32, %c0_i32_0 : i32, i32
  }
  func.func @transform_5(%arg0: i32) -> (i32, i32) {
    %c0_i32 = arith.constant 0 : i32
    %c0_i32_0 = arith.constant 0 : i32
    %c0_i32_1 = arith.constant 0 : i32
    return %c0_i32, %c0_i32_0 : i32, i32
  }
  func.func @transform_6(%arg0: i32) -> (i32, i32) {
    %c0_i32 = arith.constant 0 : i32
    %c0_i32_0 = arith.constant 0 : i32
    %c0_i32_1 = arith.constant 0 : i32
    return %c0_i32, %c0_i32_0 : i32, i32
  }
  func.func @transform_7(%arg0: i32) -> (i32, i32) {
    %c0_i32 = arith.constant 0 : i32
    %c0_i32_0 = arith.constant 0 : i32
    %c0_i32_1 = arith.constant 0 : i32
    return %c0_i32, %c0_i32_0 : i32, i32
  }
  func.func @transform_8(%arg0: i32) -> (i32, i32) {
    %c0_i32 = arith.constant 0 : i32
    %c0_i32_0 = arith.constant 0 : i32
    %c0_i32_1 = arith.constant 0 : i32
    return %c0_i32, %c0_i32_0 : i32, i32
  }
  func.func @transform_9(%arg0: i32) -> (i32, i32) {
    %c0_i32 = arith.constant 0 : i32
    %c0_i32_0 = arith.constant 0 : i32
    %c0_i32_1 = arith.constant 0 : i32
    return %c0_i32, %c0_i32_0 : i32, i32
  }
  func.func @transform_10(%arg0: i32) -> (i32, i32) {
    %c0_i32 = arith.constant 0 : i32
    %c0_i32_0 = arith.constant 0 : i32
    %c0_i32_1 = arith.constant 0 : i32
    return %c0_i32, %c0_i32_0 : i32, i32
  }
  func.func @transform_11(%arg0: i32) -> (i32, i32) {
    %c0_i32 = arith.constant 0 : i32
    %c0_i32_0 = arith.constant 0 : i32
    %c0_i32_1 = arith.constant 0 : i32
    return %c0_i32, %c0_i32_0 : i32, i32
  }
  func.func @transform_12(%arg0: i32) -> (i32, i32) {
    %c0_i32 = arith.constant 0 : i32
    %c0_i32_0 = arith.constant 0 : i32
    %c0_i32_1 = arith.constant 0 : i32
    return %c0_i32, %c0_i32_0 : i32, i32
  }
  func.func @transform_13(%arg0: i32) -> (i32, i32, i32) {
    %c0_i32 = arith.constant 0 : i32
    %c0_i32_0 = arith.constant 0 : i32
    %c0_i32_1 = arith.constant 0 : i32
    return %arg0, %c0_i32, %c0_i32_0 : i32, i32, i32
  }
}

</mosaic_0001>

<llo_original>
// kernel: tpu_custom_call.1
$region0: #{tpu_custom_call.1}
  #allocation0 [shape = 'u32[]', space=smem, size = 0x4, offset = 0x4, fixed_abs, tag = 'smem constant byte address 0x4 - core index']
  #allocation1 [shape = 'u32[144,128]{1,0:T(1,128)}', space=vmem, size = 0x12000, scoped, tag = 'internal scratch']
  #allocation2 [shape = 'bf16[8,96]{1,0:T(8,128)(2,1)}', space=vmem, size = 0x800, scoped, tag = 'scratch operand']
  %s0 = inlined_call_operand.vmem [shape: bf16[2,8,32], index: 0, kind: input, shape index: {}]
  %s1 = inlined_call_operand.vmem [shape: f32[1,32], index: 1, kind: input, shape index: {}]
  %s2 = inlined_call_operand.vmem [shape: f32[1,32], index: 2, kind: input, shape index: {}]
  %s3 = inlined_call_operand.vmem [shape: bf16[32,96], index: 3, kind: input, shape index: {}]
  %s4 = inlined_call_operand.vmem [shape: f32[1,96], index: 4, kind: input, shape index: {}]
  %s5 = inlined_call_operand.vmem [shape: bf16[32,32], index: 5, kind: input, shape index: {}]
  %s6 = inlined_call_operand.vmem [shape: f32[1,32], index: 6, kind: input, shape index: {}]
  %s7 = inlined_call_operand.vmem [shape: f32[1,32], index: 7, kind: input, shape index: {}]
  %s8 = inlined_call_operand.vmem [shape: f32[1,32], index: 8, kind: input, shape index: {}]
  %s9 = inlined_call_operand.vmem [shape: bf16[32,128], index: 9, kind: input, shape index: {}]
  %s10 = inlined_call_operand.vmem [shape: f32[1,128], index: 10, kind: input, shape index: {}]
  %s11 = inlined_call_operand.vmem [shape: bf16[128,32], index: 11, kind: input, shape index: {}]
  %s12 = inlined_call_operand.vmem [shape: f32[1,32], index: 12, kind: input, shape index: {}]
  %s13 = inlined_call_operand.hbm [shape: bf16[2,8,32], index: 13, kind: output, shape index: {}]
  %s14 = sld [smem:[#allocation0]]
  $region85: #{tpu_custom_call.1} parent=0
    _
  %s16 = ssub.s32 1, %s14
  %s17 = scalar_select 0, %s16, %s14
  $region1: #{tpu_custom_call.1} parent=0
    #allocation3 [shape = 'u8[4096]{0}', space=vmem, size = 0x1000, scoped, tag = 'output window, operand 0']
    #allocation4 [shape = 's32[2]{0}', space=sflag, size = 0x8, scoped, tag = 'scoped memory for tpu_custom_call.1']
    %18 = vsyncpa [#allocation4], 0
    %s19 = scalar_lea.sflag [#allocation4], 1
    %20 = vsyncpa %s19, 0
    loop: start=0, step=1, limit=4
    $region2: #{tpu_custom_call.1} parent=1 // loop_pre_header
      _
    $region3: #{tpu_custom_call.1} parent=1 // loop_header
      %s22 = sphi 0, %s26
      %p23 = scmp.ge.s32.totalorder %s22, 4
      %s32 = sphi 0, %s34
      %s35 = sphi 0, %s32
      %s36 = sphi 0, %s35
      %s52 = sphi 0, %s36
      %s56 = sphi 0, %s56
      %s58 = sphi 0, %s56
      %s59 = sphi 0, %s58
      %s73 = sphi 0, %s59
      %s77 = sphi 0, %s77
      %s79 = sphi 0, %s77
      %s80 = sphi 0, %s79
      %s94 = sphi 0, %s80
      %s98 = sphi 0, %s98
      %s100 = sphi 0, %s98
      %s101 = sphi 0, %s100
      %s115 = sphi 0, %s101
      %s119 = sphi 0, %s119
      %s121 = sphi 0, %s119
      %s122 = sphi 0, %s121
      %s136 = sphi 0, %s122
      %s140 = sphi 0, %s140
      %s142 = sphi 0, %s140
      %s143 = sphi 0, %s142
      %s157 = sphi 0, %s143
      %s161 = sphi 0, %s161
      %s163 = sphi 0, %s161
      %s164 = sphi 0, %s163
      %s178 = sphi 0, %s164
      %s182 = sphi 0, %s182
      %s184 = sphi 0, %s182
      %s185 = sphi 0, %s184
      %s199 = sphi 0, %s185
      %s203 = sphi 0, %s203
      %s205 = sphi 0, %s203
      %s206 = sphi 0, %s205
      %s220 = sphi 0, %s206
      %s224 = sphi 0, %s224
      %s226 = sphi 0, %s224
      %s227 = sphi 0, %s226
      %s241 = sphi 0, %s227
      %s245 = sphi 0, %s245
      %s247 = sphi 0, %s245
      %s248 = sphi 0, %s247
      %s262 = sphi 0, %s248
      %s266 = sphi 0, %s266
      %s268 = sphi 0, %s266
      %s269 = sphi 0, %s268
      %s283 = sphi 0, %s269
      %s287 = sphi 0, %s287
      %s289 = sphi 0, %s287
      %s290 = sphi 0, %s289
      %s304 = sphi 0, %s290
      %s310 = sphi 0, %s312
      %s313 = sphi 0, %s310
      %s314 = sphi 0, %s313
      %s330 = sphi 0, %s314
    $region4: #{tpu_custom_call.1} parent=1 // loop_header_branch
      %25 = sbr.rel (%p23) target = $region8
    $region5: #{tpu_custom_call.1} parent=1 // loop_body
      %s27 = ssub.s32 %s22, 1
      %s28 = ssub.s32 %s22, 2
      %s29 = sadd.s32 %s22, 1
      %s30 = ssub.s32 %s22, %s29
      %p31 = scmp.eq.s32.totalorder %s30, 0
      %s33 = sadd.s32 %s32, 1
      %s34 = scalar_select %p31, %s32, %s33
      %p37 = pneg %p31
      %p38 = scmp.eq.s32.totalorder %s22, 1
      %p39 = por %p37, %p38
      %p40 = scmp.ne.s32.totalorder %s32, %s35
      %p41 = scmp.eq.s32.totalorder %s22, 0
      %p42 = por %p40, %p41
      %p43 = scmp.ne.s32.totalorder %s32, %s35
      %p44 = scmp.eq.s32.totalorder %s27, 1
      %p45 = por %p43, %p44
      %p46 = scmp.ne.s32.totalorder %s35, %s36
      %p47 = scmp.eq.s32.totalorder %s27, 0
      %p48 = por %p46, %p47
      %p49 = scmp.ne.s32.totalorder %s35, %s36
      %p50 = scmp.eq.s32.totalorder %s28, 1
      %p51 = por %p49, %p50
      %p53 = scmp.ne.s32.totalorder %s36, %s52
      %p54 = scmp.eq.s32.totalorder %s28, 0
      %p55 = por %p53, %p54
      %s57 = sadd.s32 %s56, 1
      %p60 = scmp.eq.s32.totalorder %s22, 1
      %p61 = scmp.ne.s32.totalorder %s56, %s58
      %p62 = scmp.eq.s32.totalorder %s22, 0
      %p63 = por %p61, %p62
      %p64 = scmp.ne.s32.totalorder %s56, %s58
      %p65 = scmp.eq.s32.totalorder %s27, 1
      %p66 = por %p64, %p65
      %p67 = scmp.ne.s32.totalorder %s58, %s59
      %p68 = scmp.eq.s32.totalorder %s27, 0
      %p69 = por %p67, %p68
      %p70 = scmp.ne.s32.totalorder %s58, %s59
      %p71 = scmp.eq.s32.totalorder %s28, 1
      %p72 = por %p70, %p71
      %p74 = scmp.ne.s32.totalorder %s59, %s73
      %p75 = scmp.eq.s32.totalorder %s28, 0
      %p76 = por %p74, %p75
      %s78 = sadd.s32 %s77, 1
      %p81 = scmp.eq.s32.totalorder %s22, 1
      %p82 = scmp.ne.s32.totalorder %s77, %s79
      %p83 = scmp.eq.s32.totalorder %s22, 0
      %p84 = por %p82, %p83
      %p85 = scmp.ne.s32.totalorder %s77, %s79
      %p86 = scmp.eq.s32.totalorder %s27, 1
      %p87 = por %p85, %p86
      %p88 = scmp.ne.s32.totalorder %s79, %s80
      %p89 = scmp.eq.s32.totalorder %s27, 0
      %p90 = por %p88, %p89
      %p91 = scmp.ne.s32.totalorder %s79, %s80
      %p92 = scmp.eq.s32.totalorder %s28, 1
      %p93 = por %p91, %p92
      %p95 = scmp.ne.s32.totalorder %s80, %s94
      %p96 = scmp.eq.s32.totalorder %s28, 0
      %p97 = por %p95, %p96
      %s99 = sadd.s32 %s98, 1
      %p102 = scmp.eq.s32.totalorder %s22, 1
      %p103 = scmp.ne.s32.totalorder %s98, %s100
      %p104 = scmp.eq.s32.totalorder %s22, 0
      %p105 = por %p103, %p104
      %p106 = scmp.ne.s32.totalorder %s98, %s100
      %p107 = scmp.eq.s32.totalorder %s27, 1
      %p108 = por %p106, %p107
      %p109 = scmp.ne.s32.totalorder %s100, %s101
      %p110 = scmp.eq.s32.totalorder %s27, 0
      %p111 = por %p109, %p110
      %p112 = scmp.ne.s32.totalorder %s100, %s101
      %p113 = scmp.eq.s32.totalorder %s28, 1
      %p114 = por %p112, %p113
      %p116 = scmp.ne.s32.totalorder %s101, %s115
      %p117 = scmp.eq.s32.totalorder %s28, 0
      %p118 = por %p116, %p117
      %s120 = sadd.s32 %s119, 1
      %p123 = scmp.eq.s32.totalorder %s22, 1
      %p124 = scmp.ne.s32.totalorder %s119, %s121
      %p125 = scmp.eq.s32.totalorder %s22, 0
      %p126 = por %p124, %p125
      %p127 = scmp.ne.s32.totalorder %s119, %s121
      %p128 = scmp.eq.s32.totalorder %s27, 1
      %p129 = por %p127, %p128
      %p130 = scmp.ne.s32.totalorder %s121, %s122
      %p131 = scmp.eq.s32.totalorder %s27, 0
      %p132 = por %p130, %p131
      %p133 = scmp.ne.s32.totalorder %s121, %s122
      %p134 = scmp.eq.s32.totalorder %s28, 1
      %p135 = por %p133, %p134
      %p137 = scmp.ne.s32.totalorder %s122, %s136
      %p138 = scmp.eq.s32.totalorder %s28, 0
      %p139 = por %p137, %p138
      %s141 = sadd.s32 %s140, 1
      %p144 = scmp.eq.s32.totalorder %s22, 1
      %p145 = scmp.ne.s32.totalorder %s140, %s142
      %p146 = scmp.eq.s32.totalorder %s22, 0
      %p147 = por %p145, %p146
      %p148 = scmp.ne.s32.totalorder %s140, %s142
      %p149 = scmp.eq.s32.totalorder %s27, 1
      %p150 = por %p148, %p149
      %p151 = scmp.ne.s32.totalorder %s142, %s143
      %p152 = scmp.eq.s32.totalorder %s27, 0
      %p153 = por %p151, %p152
      %p154 = scmp.ne.s32.totalorder %s142, %s143
      %p155 = scmp.eq.s32.totalorder %s28, 1
      %p156 = por %p154, %p155
      %p158 = scmp.ne.s32.totalorder %s143, %s157
      %p159 = scmp.eq.s32.totalorder %s28, 0
      %p160 = por %p158, %p159
      %s162 = sadd.s32 %s161, 1
      %p165 = scmp.eq.s32.totalorder %s22, 1
      %p166 = scmp.ne.s32.totalorder %s161, %s163
      %p167 = scmp.eq.s32.totalorder %s22, 0
      %p168 = por %p166, %p167
      %p169 = scmp.ne.s32.totalorder %s161, %s163
      %p170 = scmp.eq.s32.totalorder %s27, 1
      %p171 = por %p169, %p170
      %p172 = scmp.ne.s32.totalorder %s163, %s164
      %p173 = scmp.eq.s32.totalorder %s27, 0
      %p174 = por %p172, %p173
      %p175 = scmp.ne.s32.totalorder %s163, %s164
      %p176 = scmp.eq.s32.totalorder %s28, 1
      %p177 = por %p175, %p176
      %p179 = scmp.ne.s32.totalorder %s164, %s178
      %p180 = scmp.eq.s32.totalorder %s28, 0
      %p181 = por %p179, %p180
      %s183 = sadd.s32 %s182, 1
      %p186 = scmp.eq.s32.totalorder %s22, 1
      %p187 = scmp.ne.s32.totalorder %s182, %s184
      %p188 = scmp.eq.s32.totalorder %s22, 0
      %p189 = por %p187, %p188
      %p190 = scmp.ne.s32.totalorder %s182, %s184
      %p191 = scmp.eq.s32.totalorder %s27, 1
      %p192 = por %p190, %p191
      %p193 = scmp.ne.s32.totalorder %s184, %s185
      %p194 = scmp.eq.s32.totalorder %s27, 0
      %p195 = por %p193, %p194
      %p196 = scmp.ne.s32.totalorder %s184, %s185
      %p197 = scmp.eq.s32.totalorder %s28, 1
      %p198 = por %p196, %p197
      %p200 = scmp.ne.s32.totalorder %s185, %s199
      %p201 = scmp.eq.s32.totalorder %s28, 0
      %p202 = por %p200, %p201
      %s204 = sadd.s32 %s203, 1
      %p207 = scmp.eq.s32.totalorder %s22, 1
      %p208 = scmp.ne.s32.totalorder %s203, %s205
      %p209 = scmp.eq.s32.totalorder %s22, 0
      %p210 = por %p208, %p209
      %p211 = scmp.ne.s32.totalorder %s203, %s205
      %p212 = scmp.eq.s32.totalorder %s27, 1
      %p213 = por %p211, %p212
      %p214 = scmp.ne.s32.totalorder %s205, %s206
      %p215 = scmp.eq.s32.totalorder %s27, 0
      %p216 = por %p214, %p215
      %p217 = scmp.ne.s32.totalorder %s205, %s206
      %p218 = scmp.eq.s32.totalorder %s28, 1
      %p219 = por %p217, %p218
      %p221 = scmp.ne.s32.totalorder %s206, %s220
      %p222 = scmp.eq.s32.totalorder %s28, 0
      %p223 = por %p221, %p222
      %s225 = sadd.s32 %s224, 1
      %p228 = scmp.eq.s32.totalorder %s22, 1
      %p229 = scmp.ne.s32.totalorder %s224, %s226
      %p230 = scmp.eq.s32.totalorder %s22, 0
      %p231 = por %p229, %p230
      %p232 = scmp.ne.s32.totalorder %s224, %s226
      %p233 = scmp.eq.s32.totalorder %s27, 1
      %p234 = por %p232, %p233
      %p235 = scmp.ne.s32.totalorder %s226, %s227
      %p236 = scmp.eq.s32.totalorder %s27, 0
      %p237 = por %p235, %p236
      %p238 = scmp.ne.s32.totalorder %s226, %s227
      %p239 = scmp.eq.s32.totalorder %s28, 1
      %p240 = por %p238, %p239
      %p242 = scmp.ne.s32.totalorder %s227, %s241
      %p243 = scmp.eq.s32.totalorder %s28, 0
      %p244 = por %p242, %p243
      %s246 = sadd.s32 %s245, 1
      %p249 = scmp.eq.s32.totalorder %s22, 1
      %p250 = scmp.ne.s32.totalorder %s245, %s247
      %p251 = scmp.eq.s32.totalorder %s22, 0
      %p252 = por %p250, %p251
      %p253 = scmp.ne.s32.totalorder %s245, %s247
      %p254 = scmp.eq.s32.totalorder %s27, 1
      %p255 = por %p253, %p254
      %p256 = scmp.ne.s32.totalorder %s247, %s248
      %p257 = scmp.eq.s32.totalorder %s27, 0
      %p258 = por %p256, %p257
      %p259 = scmp.ne.s32.totalorder %s247, %s248
      %p260 = scmp.eq.s32.totalorder %s28, 1
      %p261 = por %p259, %p260
      %p263 = scmp.ne.s32.totalorder %s248, %s262
      %p264 = scmp.eq.s32.totalorder %s28, 0
      %p265 = por %p263, %p264
      %s267 = sadd.s32 %s266, 1
      %p270 = scmp.eq.s32.totalorder %s22, 1
      %p271 = scmp.ne.s32.totalorder %s266, %s268
      %p272 = scmp.eq.s32.totalorder %s22, 0
      %p273 = por %p271, %p272
      %p274 = scmp.ne.s32.totalorder %s266, %s268
      %p275 = scmp.eq.s32.totalorder %s27, 1
      %p276 = por %p274, %p275
      %p277 = scmp.ne.s32.totalorder %s268, %s269
      %p278 = scmp.eq.s32.totalorder %s27, 0
      %p279 = por %p277, %p278
      %p280 = scmp.ne.s32.totalorder %s268, %s269
      %p281 = scmp.eq.s32.totalorder %s28, 1
      %p282 = por %p280, %p281
      %p284 = scmp.ne.s32.totalorder %s269, %s283
      %p285 = scmp.eq.s32.totalorder %s28, 0
      %p286 = por %p284, %p285
      %s288 = sadd.s32 %s287, 1
      %p291 = scmp.eq.s32.totalorder %s22, 1
      %p292 = scmp.ne.s32.totalorder %s287, %s289
      %p293 = scmp.eq.s32.totalorder %s22, 0
      %p294 = por %p292, %p293
      %p295 = scmp.ne.s32.totalorder %s287, %s289
      %p296 = scmp.eq.s32.totalorder %s27, 1
      %p297 = por %p295, %p296
      %p298 = scmp.ne.s32.totalorder %s289, %s290
      %p299 = scmp.eq.s32.totalorder %s27, 0
      %p300 = por %p298, %p299
      %p301 = scmp.ne.s32.totalorder %s289, %s290
      %p302 = scmp.eq.s32.totalorder %s28, 1
      %p303 = por %p301, %p302
      %p305 = scmp.ne.s32.totalorder %s290, %s304
      %p306 = scmp.eq.s32.totalorder %s28, 0
      %p307 = por %p305, %p306
      %s308 = ssub.s32 %s22, %s29
      %p309 = scmp.eq.s32.totalorder %s308, 0
      %s311 = sadd.s32 %s310, 1
      %s312 = scalar_select %p309, %s310, %s311
      %p315 = pneg %p309
      %p316 = scmp.eq.s32.totalorder %s22, 1
      %p317 = por %p315, %p316
      %p318 = scmp.ne.s32.totalorder %s310, %s313
      %p319 = scmp.eq.s32.totalorder %s22, 0
      %p320 = por %p318, %p319
      %p321 = scmp.ne.s32.totalorder %s310, %s313
      %p322 = scmp.eq.s32.totalorder %s27, 1
      %p323 = por %p321, %p322
      %p324 = scmp.ne.s32.totalorder %s313, %s314
      %p325 = scmp.eq.s32.totalorder %s27, 0
      %p326 = por %p324, %p325
      %p327 = scmp.ne.s32.totalorder %s313, %s314
      %p328 = scmp.eq.s32.totalorder %s28, 1
      %p329 = por %p327, %p328
      %p331 = scmp.ne.s32.totalorder %s314, %s330
      %p332 = scmp.eq.s32.totalorder %s28, 0
      %p333 = por %p331, %p332
      %p334 = scmp.le.s32.totalorder 1, %s22
      %p335 = scmp.lt.s32.totalorder %s22, 3
      %p336 = pnand %p334, %p335
      %p337 = pneg %p336
      // Predicated region
      $region9: #{tpu_custom_call.1} parent=5 // pred_check
        _
      $region10: #{tpu_custom_call.1} parent=5 // pred_check_branch
        %339 = sbr.rel (%p336) target = $region12
      $region11: #{tpu_custom_call.1} parent=5 // pred_region
        %s340 = ssub.s32 %s22, 1
        // Predicated region
        $region13: #{tpu_custom_call.1} parent=11 // pred_check
          %p341 = pneg %p69
        $region14: #{tpu_custom_call.1} parent=11 // pred_check_branch
          %343 = sbr.rel (%p341) target = $region16
        $region15: #{tpu_custom_call.1} parent=11 // pred_region
          _
        $region16: #{tpu_custom_call.1} parent=11 // pred_fallthru
          _
        // Predicated region
        $region17: #{tpu_custom_call.1} parent=11 // pred_check
          %p344 = pneg %p90
        $region18: #{tpu_custom_call.1} parent=11 // pred_check_branch
          %346 = sbr.rel (%p344) target = $region20
        $region19: #{tpu_custom_call.1} parent=11 // pred_region
          _
        $region20: #{tpu_custom_call.1} parent=11 // pred_fallthru
          _
        // Predicated region
        $region21: #{tpu_custom_call.1} parent=11 // pred_check
          %p347 = pneg %p111
        $region22: #{tpu_custom_call.1} parent=11 // pred_check_branch
          %349 = sbr.rel (%p347) target = $region24
        $region23: #{tpu_custom_call.1} parent=11 // pred_region
          _
        $region24: #{tpu_custom_call.1} parent=11 // pred_fallthru
          _
        // Predicated region
        $region25: #{tpu_custom_call.1} parent=11 // pred_check
          %p350 = pneg %p132
        $region26: #{tpu_custom_call.1} parent=11 // pred_check_branch
          %352 = sbr.rel (%p350) target = $region28
        $region27: #{tpu_custom_call.1} parent=11 // pred_region
          _
        $region28: #{tpu_custom_call.1} parent=11 // pred_fallthru
          _
        // Predicated region
        $region29: #{tpu_custom_call.1} parent=11 // pred_check
          %p353 = pneg %p153
        $region30: #{tpu_custom_call.1} parent=11 // pred_check_branch
          %355 = sbr.rel (%p353) target = $region32
        $region31: #{tpu_custom_call.1} parent=11 // pred_region
          _
        $region32: #{tpu_custom_call.1} parent=11 // pred_fallthru
          _
        // Predicated region
        $region33: #{tpu_custom_call.1} parent=11 // pred_check
          %p356 = pneg %p174
        $region34: #{tpu_custom_call.1} parent=11 // pred_check_branch
          %358 = sbr.rel (%p356) target = $region36
        $region35: #{tpu_custom_call.1} parent=11 // pred_region
          _
        $region36: #{tpu_custom_call.1} parent=11 // pred_fallthru
          _
        // Predicated region
        $region37: #{tpu_custom_call.1} parent=11 // pred_check
          %p359 = pneg %p195
        $region38: #{tpu_custom_call.1} parent=11 // pred_check_branch
          %361 = sbr.rel (%p359) target = $region40
        $region39: #{tpu_custom_call.1} parent=11 // pred_region
          _
        $region40: #{tpu_custom_call.1} parent=11 // pred_fallthru
          _
        // Predicated region
        $region41: #{tpu_custom_call.1} parent=11 // pred_check
          %p362 = pneg %p216
        $region42: #{tpu_custom_call.1} parent=11 // pred_check_branch
          %364 = sbr.rel (%p362) target = $region44
        $region43: #{tpu_custom_call.1} parent=11 // pred_region
          _
        $region44: #{tpu_custom_call.1} parent=11 // pred_fallthru
          _
        // Predicated region
        $region45: #{tpu_custom_call.1} parent=11 // pred_check
          %p365 = pneg %p237
        $region46: #{tpu_custom_call.1} parent=11 // pred_check_branch
          %367 = sbr.rel (%p365) target = $region48
        $region47: #{tpu_custom_call.1} parent=11 // pred_region
          _
        $region48: #{tpu_custom_call.1} parent=11 // pred_fallthru
          _
        // Predicated region
        $region49: #{tpu_custom_call.1} parent=11 // pred_check
          %p368 = pneg %p258
        $region50: #{tpu_custom_call.1} parent=11 // pred_check_branch
          %370 = sbr.rel (%p368) target = $region52
        $region51: #{tpu_custom_call.1} parent=11 // pred_region
          _
        $region52: #{tpu_custom_call.1} parent=11 // pred_fallthru
          _
        // Predicated region
        $region53: #{tpu_custom_call.1} parent=11 // pred_check
          %p371 = pneg %p279
        $region54: #{tpu_custom_call.1} parent=11 // pred_check_branch
          %373 = sbr.rel (%p371) target = $region56
        $region55: #{tpu_custom_call.1} parent=11 // pred_region
          _
        $region56: #{tpu_custom_call.1} parent=11 // pred_fallthru
          _
        // Predicated region
        $region57: #{tpu_custom_call.1} parent=11 // pred_check
          %p374 = pneg %p300
        $region58: #{tpu_custom_call.1} parent=11 // pred_check_branch
          %376 = sbr.rel (%p374) target = $region60
        $region59: #{tpu_custom_call.1} parent=11 // pred_region
          _
        $region60: #{tpu_custom_call.1} parent=11 // pred_fallthru
          _
      $region12: #{tpu_custom_call.1} parent=5 // pred_fallthru
        _
      %p377 = scmp.lt.s32.totalorder %s22, 2
      // Predicated region
      $region61: #{tpu_custom_call.1} parent=5 // pred_check
        %p378 = pneg %p377
      $region62: #{tpu_custom_call.1} parent=5 // pred_check_branch
        %380 = sbr.rel (%p378) target = $region64
      $region63: #{tpu_custom_call.1} parent=5 // pred_region
        // Predicated region
        $region65: #{tpu_custom_call.1} parent=63 // pred_check
          %p381 = pneg %p42
        $region66: #{tpu_custom_call.1} parent=63 // pred_check_branch
          %383 = sbr.rel (%p381) target = $region68
        $region67: #{tpu_custom_call.1} parent=63 // pred_region
          %p384 = scmp.lt.s32.totalorder %s22, 1
          %s385 = scalar_select %p384, %s22, 1
          %s386 = smul.addr %s385, 4
          %s387 = scalar_lea.vmem %s0, %s386
        $region68: #{tpu_custom_call.1} parent=63 // pred_fallthru
          _
      $region64: #{tpu_custom_call.1} parent=5 // pred_fallthru
        _
      %p388 = scmp.le.s32.totalorder 1, %s22
      %p389 = scmp.lt.s32.totalorder %s22, 3
      %p390 = pnand %p388, %p389
      %p391 = pneg %p390
      // Predicated region
      $region69: #{tpu_custom_call.1} parent=5 // pred_check
        _
      $region70: #{tpu_custom_call.1} parent=5 // pred_check_branch
        %393 = sbr.rel (%p390) target = $region72
      $region71: #{tpu_custom_call.1} parent=5 // pred_region
        %s394 = ssub.s32 %s22, 1
        %p395 = scmp.lt.s32.totalorder %s27, 1
        %s396 = scalar_select %p395, %s27, 1
        %s397 = smul.addr %s396, 4
        %s398 = scalar_lea.vmem %s0, %s397
        %p399 = pneg %p48
        %p400 = pneg %p45
        %p401 = pneg %p69
        %p402 = pneg %p66
        %p403 = pneg %p90
        %p404 = pneg %p87
        %p405 = pneg %p111
        %p406 = pneg %p108
        %p407 = pneg %p132
        %p408 = pneg %p129
        %p409 = pneg %p153
        %p410 = pneg %p150
        %p411 = pneg %p174
        %p412 = pneg %p171
        %p413 = pneg %p195
        %p414 = pneg %p192
        %p415 = pneg %p216
        %p416 = pneg %p213
        %p417 = pneg %p237
        %p418 = pneg %p234
        %p419 = pneg %p258
        %p420 = pneg %p255
        %p421 = pneg %p279
        %p422 = pneg %p276
        %p423 = pneg %p300
        %p424 = pneg %p297
        %p425 = pneg %p326
        %p426 = pneg %p323
        %s427 = sand.u32 %s313, 1
        %s428 = scalar_lea.sflag [#allocation4], %s427
        %s429 = sand.u32 %s313, 1
        %s430 = smul.addr %s429, 4
        %s431 = scalar_lea.vmem [#allocation3], %s430
        %p432 = scmp.lt.s32.totalorder %s27, 1
        %s433 = scalar_select %p432, %s27, 1
        %s434 = smul.addr %s433, 4
        %s435 = scalar_lea.vmem %s0, %s434
        %v437 = vld [vmem:[%s435] sm:$0xf]
        %v438 = vunpack.c.l.bf16 %v437
        %v439 = vld [vmem:[%s1] sm:$0x1]
        %v440 = vld [vmem:[%s2] sm:$0x1]
        %vm441 = vcmask 261120
        %v442 = vsel %vm441, %v438, 0.0
        %443 = vadd.xlane.f32.xlu0 %v442
        %v444 = vpop.xlane.xlu0 %443
        %v445 = vrcp.pop 32.0
        %v446 = vmul.f32 %v444, %v445
        %v447 = vsub.f32 %v438, %v446
        %v448 = vmul.f32 %v447, %v447
        %v449 = vsel %vm441, %v448, 0.0
        %450 = vadd.xlane.f32.xlu0 %v449
        %v451 = vpop.xlane.xlu0 %450
        %v452 = vmul.f32 %v451, %v445
        %v453 = vadd.f32 %v452, 1e-05
        %v454 = vrsqrt.pop %v453
        %v455 = vmul.f32 %v447, %v454
        %v457 = vlaneseq
        %v458 = vshrl.u32 %v457, 7
        %v459 = vsub.s32 0, %v458
        %v460 = vrot.slane %v439, %v459
        %v462 = vmul.f32 %v455, %v460
        %v464 = vlaneseq
        %v465 = vshrl.u32 %v464, 7
        %v466 = vsub.s32 0, %v465
        %v467 = vrot.slane %v440, %v466
        %v469 = vadd.f32 %v462, %v467
        %v470 = vpack.c.bf16 %v469, %v469
        %v471 = vld [vmem:[%s3] sm:$0xf]
        %v472 = vld [vmem:[%s3 + $0x4] sm:$0xf]
        %v473 = vld [vmem:[%s3 + $0x8] sm:$0xf]
        %v474 = vld [vmem:[%s3 + $0xc] sm:$0xf]
        %v475 = vld [vmem:[%s4] sm:$0x1]
        %v477 = vlaneseq
        %v478 = vshrl.u32 %v477, 7
        %v479 = vsub.s32 0, %v478
        %v480 = vrot.slane %v475, %v479
        %v486 = vunpack.c.l.b16 %v471
        %v487 = vunpack.c.l.b16 %v472
        %v488 = vunpack.c.l.b16 %v473
        %v489 = vunpack.c.l.b16 %v474
        %v490 = vpack.c.b16 %v487, %v486
        %v491 = vpack.c.b16 %v489, %v488
        %v495 = vsel %vm441, %v470, 0
        %497 = vmatprep.subr.bf16.mxu0 0
        %498 = vmatpush1.bf16.msra.mxu0 %v490
        %499 = vmatprep.subr.bf16.mxu0 0
        %500 = vmatpush1.bf16.msra.mxu0 %v491
        %501 = vmatprep.subr.bf16.mxu0 0
        %502 = vmatpush1.bf16.msra.mxu0 0
        %503 = vmatprep.subr.bf16.mxu0 0
        %504 = vmatpush1.bf16.msra.mxu0 0
        %505 = vmatprep.subr.bf16.mxu0 0
        %506 = vmatpush1.bf16.msra.mxu0 0
        %507 = vmatprep.subr.bf16.mxu0 0
        %508 = vmatpush1.bf16.msra.mxu0 0
        %509 = vmatprep.subr.bf16.mxu0 0
        %510 = vmatpush1.bf16.msra.mxu0 0
        %511 = vmatprep.subr.bf16.mxu0 0
        %512 = vmatpush1.bf16.msra.mxu0 0
        %513 = vmatprep.subr.bf16.mxu0 0
        %514 = vmatpush1.bf16.msra.mxu0 0
        %515 = vmatprep.subr.bf16.mxu0 0
        %516 = vmatpush1.bf16.msra.mxu0 0
        %517 = vmatprep.subr.bf16.mxu0 0
        %518 = vmatpush1.bf16.msra.mxu0 0
        %519 = vmatprep.subr.bf16.mxu0 0
        %520 = vmatpush1.bf16.msra.mxu0 0
        %521 = vmatprep.subr.bf16.mxu0 0
        %522 = vmatpush1.bf16.msra.mxu0 0
        %523 = vmatprep.subr.bf16.mxu0 0
        %524 = vmatpush1.bf16.msra.mxu0 0
        %525 = vmatprep.subr.bf16.mxu0 0
        %526 = vmatpush1.bf16.msra.mxu0 0
        %527 = vmatprep.subr.bf16.mxu0 0
        %528 = vmatpush1.bf16.msra.mxu0 0
        %529 = vmatprep.mubr.bf16.mxu0 0
        %530 = vmatmul.mubr.bf16.gmra.mrb[0].mxu0 %v495
        %v531 = vpop.f32.mrb[0].mxu0
        %v532 = vadd.f32 %v480, %v531
        %v533 = vpop.f32.mrb[0].mxu0
        %v534 = vpop.f32.mrb[0].mxu0
        %v535 = vpop.f32.mrb[0].mxu0
        %536 = vdwg.mxu0
        %v537 = vpack.c.bf16 %v532, %v532
        %vm538 = vcmask 781312
        %539 = vst.msk [vmem:[#allocation2] sm:$0xf] %vm538, %v537
        %v540 = vld [vmem:[#allocation2] sm:$0xf]
        %v541 = vunpack.c.l.bf16 %v540
        %543 = vrot.lane.b32.xlu0 %v541, 120
        %v544 = vpop.permute.xlu0 %543
        %546 = vrot.lane.b32.xlu0 %v541, 112
        %v547 = vpop.permute.xlu0 %546
        %549 = vrot.lane.b32.xlu0 %v541, 104
        %v550 = vpop.permute.xlu0 %549
        %v552 = vcombine.low %v541, %v547
        %v553 = vcombine.high %v541, %v547
        %v555 = vunpack.c.l.s4 1983009808
        %v556 = vunpack.c.0.s8 %v555
        %v557 = vlaneseq
        %v558 = vshrl.u32 %v557, 7
        %v559 = vsub.s32 %v556, %v558
        %v560 = vrot.slane %v552, %v559
        %v562 = vunpack.c.l.s4 1983009808
        %v563 = vunpack.c.0.s8 %v562
        %v564 = vlaneseq
        %v565 = vshrl.u32 %v564, 7
        %v566 = vsub.s32 %v563, %v565
        %v567 = vrot.slane %v553, %v566
        %v568 = vcombine.low %v544, %v550
        %v569 = vcombine.high %v544, %v550
        %v571 = vunpack.c.l.s4 1983009808
        %v572 = vunpack.c.0.s8 %v571
        %v573 = vlaneseq
        %v574 = vshrl.u32 %v573, 7
        %v575 = vsub.s32 %v572, %v574
        %v576 = vrot.slane %v568, %v575
        %v578 = vunpack.c.l.s4 1983009808
        %v579 = vunpack.c.0.s8 %v578
        %v580 = vlaneseq
        %v581 = vshrl.u32 %v580, 7
        %v582 = vsub.s32 %v579, %v581
        %v583 = vrot.slane %v569, %v582
        %v584 = vcombine.low %v560, %v576
        %v585 = vcombine.high %v560, %v576
        %v587 = vunpack.c.l.s4 1934713408
        %v588 = vunpack.c.0.s8 %v587
        %v589 = vlaneseq
        %v590 = vshrl.u32 %v589, 7
        %v591 = vsub.s32 %v588, %v590
        %v592 = vrot.slane %v584, %v591
        %v594 = vunpack.c.l.s4 1934713408
        %v595 = vunpack.c.0.s8 %v594
        %v596 = vlaneseq
        %v597 = vshrl.u32 %v596, 7
        %v598 = vsub.s32 %v595, %v597
        %v599 = vrot.slane %v585, %v598
        %v600 = vcombine.low %v567, %v583
        %v601 = vcombine.high %v567, %v583
        %v603 = vunpack.c.l.s4 1934713408
        %v604 = vunpack.c.0.s8 %v603
        %v605 = vlaneseq
        %v606 = vshrl.u32 %v605, 7
        %v607 = vsub.s32 %v604, %v606
        %v608 = vrot.slane %v600, %v607
        %v610 = vunpack.c.l.s4 1934713408
        %v611 = vunpack.c.0.s8 %v610
        %v612 = vlaneseq
        %v613 = vshrl.u32 %v612, 7
        %v614 = vsub.s32 %v611, %v613
        %v615 = vrot.slane %v601, %v614
        %v616 = vcombine.high %v592, 0.0
        %v617 = vcombine.high %v599, 0.0
        %v618 = vcombine.high %v608, 0.0
        %v619 = vcombine.high %v615, 0.0
        %v620 = vcombine.low %v592, %v599
        %v622 = vunpack.c.l.s4 1983009808
        %v623 = vunpack.c.0.s8 %v622
        %v624 = vlaneseq
        %v625 = vshrl.u32 %v624, 7
        %v626 = vsub.s32 %v623, %v625
        %v627 = vrot.slane %v620, %v626
        %v628 = vcombine.low %v616, %v617
        %v630 = vunpack.c.l.s4 1983009808
        %v631 = vunpack.c.0.s8 %v630
        %v632 = vlaneseq
        %v633 = vshrl.u32 %v632, 7
        %v634 = vsub.s32 %v631, %v633
        %v635 = vrot.slane %v628, %v634
        %v636 = vcombine.low %v608, %v615
        %v638 = vunpack.c.l.s4 1983009808
        %v639 = vunpack.c.0.s8 %v638
        %v640 = vlaneseq
        %v641 = vshrl.u32 %v640, 7
        %v642 = vsub.s32 %v639, %v641
        %v643 = vrot.slane %v636, %v642
        %v644 = vcombine.low %v618, %v619
        %v646 = vunpack.c.l.s4 1983009808
        %v647 = vunpack.c.0.s8 %v646
        %v648 = vlaneseq
        %v649 = vshrl.u32 %v648, 7
        %v650 = vsub.s32 %v647, %v649
        %v651 = vrot.slane %v644, %v650
        %v652 = vcombine.low %v627, %v635
        %v653 = vcombine.high %v627, %v635
        %v655 = vunpack.c.l.s4 1934713408
        %v656 = vunpack.c.0.s8 %v655
        %v657 = vlaneseq
        %v658 = vshrl.u32 %v657, 7
        %v659 = vsub.s32 %v656, %v658
        %v660 = vrot.slane %v652, %v659
        %v662 = vunpack.c.l.s4 1934713408
        %v663 = vunpack.c.0.s8 %v662
        %v664 = vlaneseq
        %v665 = vshrl.u32 %v664, 7
        %v666 = vsub.s32 %v663, %v665
        %v667 = vrot.slane %v653, %v666
        %v668 = vcombine.low %v643, %v651
        %v669 = vcombine.high %v643, %v651
        %v671 = vunpack.c.l.s4 1934713408
        %v672 = vunpack.c.0.s8 %v671
        %v673 = vlaneseq
        %v674 = vshrl.u32 %v673, 7
        %v675 = vsub.s32 %v672, %v674
        %v676 = vrot.slane %v668, %v675
        %v678 = vunpack.c.l.s4 1934713408
        %v679 = vunpack.c.0.s8 %v678
        %v680 = vlaneseq
        %v681 = vshrl.u32 %v680, 7
        %v682 = vsub.s32 %v679, %v681
        %v683 = vrot.slane %v669, %v682
        %v684 = vcombine.low %v660, %v676
        %v685 = vcombine.high %v660, %v676
        %v686 = vcombine.low %v667, %v683
        %v687 = vcombine.high %v667, %v683
        %v688 = vpack.c.bf16 %v684, %v684
        %v689 = vpack.c.bf16 %v685, %v685
        %v690 = vpack.c.bf16 %v686, %v686
        %v691 = vpack.c.bf16 %v687, %v687
        %692 = vrot.lane.b32.xlu0 %v541, 96
        %v693 = vpop.permute.xlu0 %692
        %694 = vrot.lane.b32.xlu0 %v544, 96
        %v695 = vpop.permute.xlu0 %694
        %696 = vrot.lane.b32.xlu0 %v547, 96
        %v697 = vpop.permute.xlu0 %696
        %698 = vrot.lane.b32.xlu0 %v550, 96
        %v699 = vpop.permute.xlu0 %698
        %v704 = vcombine.low %v693, %v697
        %v705 = vcombine.high %v693, %v697
        %v707 = vunpack.c.l.s4 1983009808
        %v708 = vunpack.c.0.s8 %v707
        %v709 = vlaneseq
        %v710 = vshrl.u32 %v709, 7
        %v711 = vsub.s32 %v708, %v710
        %v712 = vrot.slane %v704, %v711
        %v714 = vunpack.c.l.s4 1983009808
        %v715 = vunpack.c.0.s8 %v714
        %v716 = vlaneseq
        %v717 = vshrl.u32 %v716, 7
        %v718 = vsub.s32 %v715, %v717
        %v719 = vrot.slane %v705, %v718
        %v720 = vcombine.low %v695, %v699
        %v721 = vcombine.high %v695, %v699
        %v723 = vunpack.c.l.s4 1983009808
        %v724 = vunpack.c.0.s8 %v723
        %v725 = vlaneseq
        %v726 = vshrl.u32 %v725, 7
        %v727 = vsub.s32 %v724, %v726
        %v728 = vrot.slane %v720, %v727
        %v730 = vunpack.c.l.s4 1983009808
        %v731 = vunpack.c.0.s8 %v730
        %v732 = vlaneseq
        %v733 = vshrl.u32 %v732, 7
        %v734 = vsub.s32 %v731, %v733
        %v735 = vrot.slane %v721, %v734
        %v736 = vcombine.low %v712, %v728
        %v737 = vcombine.high %v712, %v728
        %v739 = vunpack.c.l.s4 1934713408
        %v740 = vunpack.c.0.s8 %v739
        %v741 = vlaneseq
        %v742 = vshrl.u32 %v741, 7
        %v743 = vsub.s32 %v740, %v742
        %v744 = vrot.slane %v736, %v743
        %v746 = vunpack.c.l.s4 1934713408
        %v747 = vunpack.c.0.s8 %v746
        %v748 = vlaneseq
        %v749 = vshrl.u32 %v748, 7
        %v750 = vsub.s32 %v747, %v749
        %v751 = vrot.slane %v737, %v750
        %v752 = vcombine.low %v719, %v735
        %v753 = vcombine.high %v719, %v735
        %v755 = vunpack.c.l.s4 1934713408
        %v756 = vunpack.c.0.s8 %v755
        %v757 = vlaneseq
        %v758 = vshrl.u32 %v757, 7
        %v759 = vsub.s32 %v756, %v758
        %v760 = vrot.slane %v752, %v759
        %v762 = vunpack.c.l.s4 1934713408
        %v763 = vunpack.c.0.s8 %v762
        %v764 = vlaneseq
        %v765 = vshrl.u32 %v764, 7
        %v766 = vsub.s32 %v763, %v765
        %v767 = vrot.slane %v753, %v766
        %v768 = vcombine.high %v744, 0.0
        %v769 = vcombine.high %v751, 0.0
        %v770 = vcombine.high %v760, 0.0
        %v771 = vcombine.high %v767, 0.0
        %v772 = vcombine.low %v744, %v751
        %v774 = vunpack.c.l.s4 1983009808
        %v775 = vunpack.c.0.s8 %v774
        %v776 = vlaneseq
        %v777 = vshrl.u32 %v776, 7
        %v778 = vsub.s32 %v775, %v777
        %v779 = vrot.slane %v772, %v778
        %v780 = vcombine.low %v768, %v769
        %v782 = vunpack.c.l.s4 1983009808
        %v783 = vunpack.c.0.s8 %v782
        %v784 = vlaneseq
        %v785 = vshrl.u32 %v784, 7
        %v786 = vsub.s32 %v783, %v785
        %v787 = vrot.slane %v780, %v786
        %v788 = vcombine.low %v760, %v767
        %v790 = vunpack.c.l.s4 1983009808
        %v791 = vunpack.c.0.s8 %v790
        %v792 = vlaneseq
        %v793 = vshrl.u32 %v792, 7
        %v794 = vsub.s32 %v791, %v793
        %v795 = vrot.slane %v788, %v794
        %v796 = vcombine.low %v770, %v771
        %v798 = vunpack.c.l.s4 1983009808
        %v799 = vunpack.c.0.s8 %v798
        %v800 = vlaneseq
        %v801 = vshrl.u32 %v800, 7
        %v802 = vsub.s32 %v799, %v801
        %v803 = vrot.slane %v796, %v802
        %v804 = vcombine.low %v779, %v787
        %v805 = vcombine.high %v779, %v787
        %v807 = vunpack.c.l.s4 1934713408
        %v808 = vunpack.c.0.s8 %v807
        %v809 = vlaneseq
        %v810 = vshrl.u32 %v809, 7
        %v811 = vsub.s32 %v808, %v810
        %v812 = vrot.slane %v804, %v811
        %v814 = vunpack.c.l.s4 1934713408
        %v815 = vunpack.c.0.s8 %v814
        %v816 = vlaneseq
        %v817 = vshrl.u32 %v816, 7
        %v818 = vsub.s32 %v815, %v817
        %v819 = vrot.slane %v805, %v818
        %v820 = vcombine.low %v795, %v803
        %v821 = vcombine.high %v795, %v803
        %v823 = vunpack.c.l.s4 1934713408
        %v824 = vunpack.c.0.s8 %v823
        %v825 = vlaneseq
        %v826 = vshrl.u32 %v825, 7
        %v827 = vsub.s32 %v824, %v826
        %v828 = vrot.slane %v820, %v827
        %v830 = vunpack.c.l.s4 1934713408
        %v831 = vunpack.c.0.s8 %v830
        %v832 = vlaneseq
        %v833 = vshrl.u32 %v832, 7
        %v834 = vsub.s32 %v831, %v833
        %v835 = vrot.slane %v821, %v834
        %v836 = vcombine.low %v812, %v828
        %v837 = vcombine.high %v812, %v828
        %v838 = vcombine.low %v819, %v835
        %v839 = vcombine.high %v819, %v835
        %v840 = vpack.c.bf16 %v836, %v836
        %v841 = vpack.c.bf16 %v837, %v837
        %v842 = vpack.c.bf16 %v838, %v838
        %v843 = vpack.c.bf16 %v839, %v839
        %844 = vrot.lane.b32.xlu0 %v541, 64
        %v845 = vpop.permute.xlu0 %844
        %846 = vrot.lane.b32.xlu0 %v544, 64
        %v847 = vpop.permute.xlu0 %846
        %848 = vrot.lane.b32.xlu0 %v547, 64
        %v849 = vpop.permute.xlu0 %848
        %850 = vrot.lane.b32.xlu0 %v550, 64
        %v851 = vpop.permute.xlu0 %850
        %v856 = vcombine.low %v845, %v849
        %v857 = vcombine.high %v845, %v849
        %v859 = vunpack.c.l.s4 1983009808
        %v860 = vunpack.c.0.s8 %v859
        %v861 = vlaneseq
        %v862 = vshrl.u32 %v861, 7
        %v863 = vsub.s32 %v860, %v862
        %v864 = vrot.slane %v856, %v863
        %v866 = vunpack.c.l.s4 1983009808
        %v867 = vunpack.c.0.s8 %v866
        %v868 = vlaneseq
        %v869 = vshrl.u32 %v868, 7
        %v870 = vsub.s32 %v867, %v869
        %v871 = vrot.slane %v857, %v870
        %v872 = vcombine.low %v847, %v851
        %v873 = vcombine.high %v847, %v851
        %v875 = vunpack.c.l.s4 1983009808
        %v876 = vunpack.c.0.s8 %v875
        %v877 = vlaneseq
        %v878 = vshrl.u32 %v877, 7
        %v879 = vsub.s32 %v876, %v878
        %v880 = vrot.slane %v872, %v879
        %v882 = vunpack.c.l.s4 1983009808
        %v883 = vunpack.c.0.s8 %v882
        %v884 = vlaneseq
        %v885 = vshrl.u32 %v884, 7
        %v886 = vsub.s32 %v883, %v885
        %v887 = vrot.slane %v873, %v886
        %v888 = vcombine.low %v864, %v880
        %v889 = vcombine.high %v864, %v880
        %v891 = vunpack.c.l.s4 1934713408
        %v892 = vunpack.c.0.s8 %v891
        %v893 = vlaneseq
        %v894 = vshrl.u32 %v893, 7
        %v895 = vsub.s32 %v892, %v894
        %v896 = vrot.slane %v888, %v895
        %v898 = vunpack.c.l.s4 1934713408
        %v899 = vunpack.c.0.s8 %v898
        %v900 = vlaneseq
        %v901 = vshrl.u32 %v900, 7
        %v902 = vsub.s32 %v899, %v901
        %v903 = vrot.slane %v889, %v902
        %v904 = vcombine.low %v871, %v887
        %v905 = vcombine.high %v871, %v887
        %v907 = vunpack.c.l.s4 1934713408
        %v908 = vunpack.c.0.s8 %v907
        %v909 = vlaneseq
        %v910 = vshrl.u32 %v909, 7
        %v911 = vsub.s32 %v908, %v910
        %v912 = vrot.slane %v904, %v911
        %v914 = vunpack.c.l.s4 1934713408
        %v915 = vunpack.c.0.s8 %v914
        %v916 = vlaneseq
        %v917 = vshrl.u32 %v916, 7
        %v918 = vsub.s32 %v915, %v917
        %v919 = vrot.slane %v905, %v918
        %v920 = vcombine.high %v896, 0.0
        %v921 = vcombine.high %v903, 0.0
        %v922 = vcombine.high %v912, 0.0
        %v923 = vcombine.high %v919, 0.0
        %v924 = vcombine.low %v896, %v903
        %v926 = vunpack.c.l.s4 1983009808
        %v927 = vunpack.c.0.s8 %v926
        %v928 = vlaneseq
        %v929 = vshrl.u32 %v928, 7
        %v930 = vsub.s32 %v927, %v929
        %v931 = vrot.slane %v924, %v930
        %v932 = vcombine.low %v920, %v921
        %v934 = vunpack.c.l.s4 1983009808
        %v935 = vunpack.c.0.s8 %v934
        %v936 = vlaneseq
        %v937 = vshrl.u32 %v936, 7
        %v938 = vsub.s32 %v935, %v937
        %v939 = vrot.slane %v932, %v938
        %v940 = vcombine.low %v912, %v919
        %v942 = vunpack.c.l.s4 1983009808
        %v943 = vunpack.c.0.s8 %v942
        %v944 = vlaneseq
        %v945 = vshrl.u32 %v944, 7
        %v946 = vsub.s32 %v943, %v945
        %v947 = vrot.slane %v940, %v946
        %v948 = vcombine.low %v922, %v923
        %v950 = vunpack.c.l.s4 1983009808
        %v951 = vunpack.c.0.s8 %v950
        %v952 = vlaneseq
        %v953 = vshrl.u32 %v952, 7
        %v954 = vsub.s32 %v951, %v953
        %v955 = vrot.slane %v948, %v954
        %v956 = vcombine.low %v931, %v939
        %v957 = vcombine.high %v931, %v939
        %v959 = vunpack.c.l.s4 1934713408
        %v960 = vunpack.c.0.s8 %v959
        %v961 = vlaneseq
        %v962 = vshrl.u32 %v961, 7
        %v963 = vsub.s32 %v960, %v962
        %v964 = vrot.slane %v956, %v963
        %v966 = vunpack.c.l.s4 1934713408
        %v967 = vunpack.c.0.s8 %v966
        %v968 = vlaneseq
        %v969 = vshrl.u32 %v968, 7
        %v970 = vsub.s32 %v967, %v969
        %v971 = vrot.slane %v957, %v970
        %v972 = vcombine.low %v947, %v955
        %v973 = vcombine.high %v947, %v955
        %v975 = vunpack.c.l.s4 1934713408
        %v976 = vunpack.c.0.s8 %v975
        %v977 = vlaneseq
        %v978 = vshrl.u32 %v977, 7
        %v979 = vsub.s32 %v976, %v978
        %v980 = vrot.slane %v972, %v979
        %v982 = vunpack.c.l.s4 1934713408
        %v983 = vunpack.c.0.s8 %v982
        %v984 = vlaneseq
        %v985 = vshrl.u32 %v984, 7
        %v986 = vsub.s32 %v983, %v985
        %v987 = vrot.slane %v973, %v986
        %v988 = vcombine.low %v964, %v980
        %v989 = vcombine.high %v964, %v980
        %v990 = vcombine.low %v971, %v987
        %v991 = vcombine.high %v971, %v987
        %v992 = vpack.c.bf16 %v988, %v988
        %v993 = vpack.c.bf16 %v989, %v989
        %v994 = vpack.c.bf16 %v990, %v990
        %v995 = vpack.c.bf16 %v991, %v991
        %vm996 = vcmask 64512
        %v998 = vsel %vm996, %v688, 0
        %v1001 = vsel %vm996, %v840, 0
        %1003 = vmatprep.subr.bf16.mxu0 0
        %1004 = vmatpush1.bf16.xpose.msra.mxu0 %v1001
        %1005 = vmatprep.subr.bf16.mxu0 0
        %1006 = vmatpush1.bf16.xpose.msra.mxu0 0
        %1007 = vmatprep.subr.bf16.mxu0 0
        %1008 = vmatpush1.bf16.xpose.msra.mxu0 0
        %1009 = vmatprep.subr.bf16.mxu0 0
        %1010 = vmatpush1.bf16.xpose.msra.mxu0 0
        %1011 = vmatprep.subr.bf16.mxu0 0
        %1012 = vmatpush1.bf16.xpose.msra.mxu0 0
        %1013 = vmatprep.subr.bf16.mxu0 0
        %1014 = vmatpush1.bf16.xpose.msra.mxu0 0
        %1015 = vmatprep.subr.bf16.mxu0 0
        %1016 = vmatpush1.bf16.xpose.msra.mxu0 0
        %1017 = vmatprep.subr.bf16.mxu0 0
        %1018 = vmatpush1.bf16.xpose.msra.mxu0 0
        %1019 = vmatprep.subr.bf16.mxu0 0
        %1020 = vmatpush1.bf16.xpose.msra.mxu0 0
        %1021 = vmatprep.subr.bf16.mxu0 0
        %1022 = vmatpush1.bf16.xpose.msra.mxu0 0
        %1023 = vmatprep.subr.bf16.mxu0 0
        %1024 = vmatpush1.bf16.xpose.msra.mxu0 0
        %1025 = vmatprep.subr.bf16.mxu0 0
        %1026 = vmatpush1.bf16.xpose.msra.mxu0 0
        %1027 = vmatprep.subr.bf16.mxu0 0
        %1028 = vmatpush1.bf16.xpose.msra.mxu0 0
        %1029 = vmatprep.subr.bf16.mxu0 0
        %1030 = vmatpush1.bf16.xpose.msra.mxu0 0
        %1031 = vmatprep.subr.bf16.mxu0 0
        %1032 = vmatpush1.bf16.xpose.msra.mxu0 0
        %1033 = vmatprep.subr.bf16.mxu0 0
        %1034 = vmatpush1.bf16.xpose.msra.mxu0 0
        %1035 = vmatprep.mubr.bf16.mxu0 0
        %1036 = vmatmul.mubr.bf16.gmra.mrb[0].mxu0 %v998
        %v1037 = vpop.f32.mrb[0].mxu0
        %v1038 = vadd.f32 0.0, %v1037
        %v1039 = vpop.f32.mrb[0].mxu0
        %v1040 = vpop.f32.mrb[0].mxu0
        %v1041 = vpop.f32.mrb[0].mxu0
        %1042 = vdwg.mxu0
        %v1044 = vsel %vm996, %v689, 0
        %v1047 = vsel %vm996, %v841, 0
        %1049 = vmatprep.subr.bf16.mxu0 0
        %1050 = vmatpush1.bf16.xpose.msra.mxu0 %v1047
        %1051 = vmatprep.subr.bf16.mxu0 0
        %1052 = vmatpush1.bf16.xpose.msra.mxu0 0
        %1053 = vmatprep.subr.bf16.mxu0 0
        %1054 = vmatpush1.bf16.xpose.msra.mxu0 0
        %1055 = vmatprep.subr.bf16.mxu0 0
        %1056 = vmatpush1.bf16.xpose.msra.mxu0 0
        %1057 = vmatprep.subr.bf16.mxu0 0
        %1058 = vmatpush1.bf16.xpose.msra.mxu0 0
        %1059 = vmatprep.subr.bf16.mxu0 0
        %1060 = vmatpush1.bf16.xpose.msra.mxu0 0
        %1061 = vmatprep.subr.bf16.mxu0 0
        %1062 = vmatpush1.bf16.xpose.msra.mxu0 0
        %1063 = vmatprep.subr.bf16.mxu0 0
        %1064 = vmatpush1.bf16.xpose.msra.mxu0 0
        %1065 = vmatprep.subr.bf16.mxu0 0
        %1066 = vmatpush1.bf16.xpose.msra.mxu0 0
        %1067 = vmatprep.subr.bf16.mxu0 0
        %1068 = vmatpush1.bf16.xpose.msra.mxu0 0
        %1069 = vmatprep.subr.bf16.mxu0 0
        %1070 = vmatpush1.bf16.xpose.msra.mxu0 0
        %1071 = vmatprep.subr.bf16.mxu0 0
        %1072 = vmatpush1.bf16.xpose.msra.mxu0 0
        %1073 = vmatprep.subr.bf16.mxu0 0
        %1074 = vmatpush1.bf16.xpose.msra.mxu0 0
        %1075 = vmatprep.subr.bf16.mxu0 0
        %1076 = vmatpush1.bf16.xpose.msra.mxu0 0
        %1077 = vmatprep.subr.bf16.mxu0 0
        %1078 = vmatpush1.bf16.xpose.msra.mxu0 0
        %1079 = vmatprep.subr.bf16.mxu0 0
        %1080 = vmatpush1.bf16.xpose.msra.mxu0 0
        %1081 = vmatprep.mubr.bf16.mxu0 0
        %1082 = vmatmul.mubr.bf16.gmra.mrb[0].mxu0 %v1044
        %v1083 = vpop.f32.mrb[0].mxu0
        %v1084 = vadd.f32 0.0, %v1083
        %v1085 = vpop.f32.mrb[0].mxu0
        %v1086 = vpop.f32.mrb[0].mxu0
        %v1087 = vpop.f32.mrb[0].mxu0
        %1088 = vdwg.mxu0
        %v1090 = vsel %vm996, %v690, 0
        %v1093 = vsel %vm996, %v842, 0
        %1095 = vmatprep.subr.bf16.mxu0 0
        %1096 = vmatpush1.bf16.xpose.msra.mxu0 %v1093
        %1097 = vmatprep.subr.bf16.mxu0 0
        %1098 = vmatpush1.bf16.xpose.msra.mxu0 0
        %1099 = vmatprep.subr.bf16.mxu0 0
        %1100 = vmatpush1.bf16.xpose.msra.mxu0 0
        %1101 = vmatprep.subr.bf16.mxu0 0
        %1102 = vmatpush1.bf16.xpose.msra.mxu0 0
        %1103 = vmatprep.subr.bf16.mxu0 0
        %1104 = vmatpush1.bf16.xpose.msra.mxu0 0
        %1105 = vmatprep.subr.bf16.mxu0 0
        %1106 = vmatpush1.bf16.xpose.msra.mxu0 0
        %1107 = vmatprep.subr.bf16.mxu0 0
        %1108 = vmatpush1.bf16.xpose.msra.mxu0 0
        %1109 = vmatprep.subr.bf16.mxu0 0
        %1110 = vmatpush1.bf16.xpose.msra.mxu0 0
        %1111 = vmatprep.subr.bf16.mxu0 0
        %1112 = vmatpush1.bf16.xpose.msra.mxu0 0
        %1113 = vmatprep.subr.bf16.mxu0 0
        %1114 = vmatpush1.bf16.xpose.msra.mxu0 0
        %1115 = vmatprep.subr.bf16.mxu0 0
        %1116 = vmatpush1.bf16.xpose.msra.mxu0 0
        %1117 = vmatprep.subr.bf16.mxu0 0
        %1118 = vmatpush1.bf16.xpose.msra.mxu0 0
        %1119 = vmatprep.subr.bf16.mxu0 0
        %1120 = vmatpush1.bf16.xpose.msra.mxu0 0
        %1121 = vmatprep.subr.bf16.mxu0 0
        %1122 = vmatpush1.bf16.xpose.msra.mxu0 0
        %1123 = vmatprep.subr.bf16.mxu0 0
        %1124 = vmatpush1.bf16.xpose.msra.mxu0 0
        %1125 = vmatprep.subr.bf16.mxu0 0
        %1126 = vmatpush1.bf16.xpose.msra.mxu0 0
        %1127 = vmatprep.mubr.bf16.mxu0 0
        %1128 = vmatmul.mubr.bf16.gmra.mrb[0].mxu0 %v1090
        %v1129 = vpop.f32.mrb[0].mxu0
        %v1130 = vadd.f32 0.0, %v1129
        %v1131 = vpop.f32.mrb[0].mxu0
        %v1132 = vpop.f32.mrb[0].mxu0
        %v1133 = vpop.f32.mrb[0].mxu0
        %1134 = vdwg.mxu0
        %v1136 = vsel %vm996, %v691, 0
        %v1139 = vsel %vm996, %v843, 0
        %1141 = vmatprep.subr.bf16.mxu0 0
        %1142 = vmatpush1.bf16.xpose.msra.mxu0 %v1139
        %1143 = vmatprep.subr.bf16.mxu0 0
        %1144 = vmatpush1.bf16.xpose.msra.mxu0 0
        %1145 = vmatprep.subr.bf16.mxu0 0
        %1146 = vmatpush1.bf16.xpose.msra.mxu0 0
        %1147 = vmatprep.subr.bf16.mxu0 0
        %1148 = vmatpush1.bf16.xpose.msra.mxu0 0
        %1149 = vmatprep.subr.bf16.mxu0 0
        %1150 = vmatpush1.bf16.xpose.msra.mxu0 0
        %1151 = vmatprep.subr.bf16.mxu0 0
        %1152 = vmatpush1.bf16.xpose.msra.mxu0 0
        %1153 = vmatprep.subr.bf16.mxu0 0
        %1154 = vmatpush1.bf16.xpose.msra.mxu0 0
        %1155 = vmatprep.subr.bf16.mxu0 0
        %1156 = vmatpush1.bf16.xpose.msra.mxu0 0
        %1157 = vmatprep.subr.bf16.mxu0 0
        %1158 = vmatpush1.bf16.xpose.msra.mxu0 0
        %1159 = vmatprep.subr.bf16.mxu0 0
        %1160 = vmatpush1.bf16.xpose.msra.mxu0 0
        %1161 = vmatprep.subr.bf16.mxu0 0
        %1162 = vmatpush1.bf16.xpose.msra.mxu0 0
        %1163 = vmatprep.subr.bf16.mxu0 0
        %1164 = vmatpush1.bf16.xpose.msra.mxu0 0
        %1165 = vmatprep.subr.bf16.mxu0 0
        %1166 = vmatpush1.bf16.xpose.msra.mxu0 0
        %1167 = vmatprep.subr.bf16.mxu0 0
        %1168 = vmatpush1.bf16.xpose.msra.mxu0 0
        %1169 = vmatprep.subr.bf16.mxu0 0
        %1170 = vmatpush1.bf16.xpose.msra.mxu0 0
        %1171 = vmatprep.subr.bf16.mxu0 0
        %1172 = vmatpush1.bf16.xpose.msra.mxu0 0
        %1173 = vmatprep.mubr.bf16.mxu0 0
        %1174 = vmatmul.mubr.bf16.gmra.mrb[0].mxu0 %v1136
        %v1175 = vpop.f32.mrb[0].mxu0
        %v1176 = vadd.f32 0.0, %v1175
        %v1177 = vpop.f32.mrb[0].mxu0
        %v1178 = vpop.f32.mrb[0].mxu0
        %v1179 = vpop.f32.mrb[0].mxu0
        %1180 = vdwg.mxu0
        %v1181 = vmul.f32 %v1038, 0.35355338
        %v1182 = vmul.f32 %v1084, 0.35355338
        %v1183 = vmul.f32 %v1130, 0.35355338
        %v1184 = vmul.f32 %v1176, 0.35355338
        %v1185 = vsel %vm996, %v1181, -inf
        %1186 = vmax.xlane.f32.xlu0 %v1185
        %v1187 = vpop.xlane.xlu0 %1186
        %v1188 = vsel %vm996, %v1182, -inf
        %1189 = vmax.xlane.f32.xlu0 %v1188
        %v1190 = vpop.xlane.xlu0 %1189
        %v1191 = vsel %vm996, %v1183, -inf
        %1192 = vmax.xlane.f32.xlu0 %v1191
        %v1193 = vpop.xlane.xlu0 %1192
        %v1194 = vsel %vm996, %v1184, -inf
        %1195 = vmax.xlane.f32.xlu0 %v1194
        %v1196 = vpop.xlane.xlu0 %1195
        %v1197 = vsub.f32 %v1181, %v1187
        %v1198 = vsub.f32 %v1182, %v1190
        %v1199 = vsub.f32 %v1183, %v1193
        %v1200 = vsub.f32 %v1184, %v1196
        %v1201 = vmul.f32 %v1197, 1.442695
        %v1202 = vpow.pop %v1201
        %v1203 = vmul.f32 %v1198, 1.442695
        %v1204 = vpow.pop %v1203
        %v1205 = vmul.f32 %v1199, 1.442695
        %v1206 = vpow.pop %v1205
        %v1207 = vmul.f32 %v1200, 1.442695
        %v1208 = vpow.pop %v1207
        %v1209 = vsel %vm996, %v1202, 0.0
        %1210 = vadd.xlane.f32.xlu0 %v1209
        %v1211 = vpop.xlane.xlu0 %1210
        %v1212 = vsel %vm996, %v1204, 0.0
        %1213 = vadd.xlane.f32.xlu0 %v1212
        %v1214 = vpop.xlane.xlu0 %1213
        %v1215 = vsel %vm996, %v1206, 0.0
        %1216 = vadd.xlane.f32.xlu0 %v1215
        %v1217 = vpop.xlane.xlu0 %1216
        %v1218 = vsel %vm996, %v1208, 0.0
        %1219 = vadd.xlane.f32.xlu0 %v1218
        %v1220 = vpop.xlane.xlu0 %1219
        %v1221 = vrcp.pop %v1211
        %v1222 = vrcp.pop %v1214
        %v1223 = vrcp.pop %v1217
        %v1224 = vrcp.pop %v1220
        %v1225 = vmul.f32 %v1202, %v1221
        %v1226 = vmul.f32 %v1204, %v1222
        %v1227 = vmul.f32 %v1206, %v1223
        %v1228 = vmul.f32 %v1208, %v1224
        %v1229 = vpack.c.bf16 %v1225, %v1225
        %v1230 = vpack.c.bf16 %v1226, %v1226
        %v1231 = vpack.c.bf16 %v1227, %v1227
        %v1232 = vpack.c.bf16 %v1228, %v1228
        %v1234 = vsel %vm996, %v1229, 0
        %vm1236 = vcmask 1043456
        %v1238 = vsel %vm1236, %v992, 0
        %1240 = vmatprep.subr.bf16.mxu0 0
        %1241 = vmatpush1.bf16.msra.mxu0 %v1238
        %1242 = vmatprep.subr.bf16.mxu0 0
        %1243 = vmatpush1.bf16.msra.mxu0 0
        %1244 = vmatprep.subr.bf16.mxu0 0
        %1245 = vmatpush1.bf16.msra.mxu0 0
        %1246 = vmatprep.subr.bf16.mxu0 0
        %1247 = vmatpush1.bf16.msra.mxu0 0
        %1248 = vmatprep.subr.bf16.mxu0 0
        %1249 = vmatpush1.bf16.msra.mxu0 0
        %1250 = vmatprep.subr.bf16.mxu0 0
        %1251 = vmatpush1.bf16.msra.mxu0 0
        %1252 = vmatprep.subr.bf16.mxu0 0
        %1253 = vmatpush1.bf16.msra.mxu0 0
        %1254 = vmatprep.subr.bf16.mxu0 0
        %1255 = vmatpush1.bf16.msra.mxu0 0
        %1256 = vmatprep.subr.bf16.mxu0 0
        %1257 = vmatpush1.bf16.msra.mxu0 0
        %1258 = vmatprep.subr.bf16.mxu0 0
        %1259 = vmatpush1.bf16.msra.mxu0 0
        %1260 = vmatprep.subr.bf16.mxu0 0
        %1261 = vmatpush1.bf16.msra.mxu0 0
        %1262 = vmatprep.subr.bf16.mxu0 0
        %1263 = vmatpush1.bf16.msra.mxu0 0
        %1264 = vmatprep.subr.bf16.mxu0 0
        %1265 = vmatpush1.bf16.msra.mxu0 0
        %1266 = vmatprep.subr.bf16.mxu0 0
        %1267 = vmatpush1.bf16.msra.mxu0 0
        %1268 = vmatprep.subr.bf16.mxu0 0
        %1269 = vmatpush1.bf16.msra.mxu0 0
        %1270 = vmatprep.subr.bf16.mxu0 0
        %1271 = vmatpush1.bf16.msra.mxu0 0
        %1272 = vmatprep.mubr.bf16.mxu0 0
        %1273 = vmatmul.mubr.bf16.gmra.mrb[0].mxu0 %v1234
        %v1274 = vpop.f32.mrb[0].mxu0
        %v1275 = vadd.f32 0.0, %v1274
        %v1276 = vpop.f32.mrb[0].mxu0
        %v1277 = vpop.f32.mrb[0].mxu0
        %v1278 = vpop.f32.mrb[0].mxu0
        %1279 = vdwg.mxu0
        %v1281 = vsel %vm996, %v1230, 0
        %v1284 = vsel %vm1236, %v993, 0
        %1286 = vmatprep.subr.bf16.mxu0 0
        %1287 = vmatpush1.bf16.msra.mxu0 %v1284
        %1288 = vmatprep.subr.bf16.mxu0 0
        %1289 = vmatpush1.bf16.msra.mxu0 0
        %1290 = vmatprep.subr.bf16.mxu0 0
        %1291 = vmatpush1.bf16.msra.mxu0 0
        %1292 = vmatprep.subr.bf16.mxu0 0
        %1293 = vmatpush1.bf16.msra.mxu0 0
        %1294 = vmatprep.subr.bf16.mxu0 0
        %1295 = vmatpush1.bf16.msra.mxu0 0
        %1296 = vmatprep.subr.bf16.mxu0 0
        %1297 = vmatpush1.bf16.msra.mxu0 0
        %1298 = vmatprep.subr.bf16.mxu0 0
        %1299 = vmatpush1.bf16.msra.mxu0 0
        %1300 = vmatprep.subr.bf16.mxu0 0
        %1301 = vmatpush1.bf16.msra.mxu0 0
        %1302 = vmatprep.subr.bf16.mxu0 0
        %1303 = vmatpush1.bf16.msra.mxu0 0
        %1304 = vmatprep.subr.bf16.mxu0 0
        %1305 = vmatpush1.bf16.msra.mxu0 0
        %1306 = vmatprep.subr.bf16.mxu0 0
        %1307 = vmatpush1.bf16.msra.mxu0 0
        %1308 = vmatprep.subr.bf16.mxu0 0
        %1309 = vmatpush1.bf16.msra.mxu0 0
        %1310 = vmatprep.subr.bf16.mxu0 0
        %1311 = vmatpush1.bf16.msra.mxu0 0
        %1312 = vmatprep.subr.bf16.mxu0 0
        %1313 = vmatpush1.bf16.msra.mxu0 0
        %1314 = vmatprep.subr.bf16.mxu0 0
        %1315 = vmatpush1.bf16.msra.mxu0 0
        %1316 = vmatprep.subr.bf16.mxu0 0
        %1317 = vmatpush1.bf16.msra.mxu0 0
        %1318 = vmatprep.mubr.bf16.mxu0 0
        %1319 = vmatmul.mubr.bf16.gmra.mrb[0].mxu0 %v1281
        %v1320 = vpop.f32.mrb[0].mxu0
        %v1321 = vadd.f32 0.0, %v1320
        %v1322 = vpop.f32.mrb[0].mxu0
        %v1323 = vpop.f32.mrb[0].mxu0
        %v1324 = vpop.f32.mrb[0].mxu0
        %1325 = vdwg.mxu0
        %v1327 = vsel %vm996, %v1231, 0
        %v1330 = vsel %vm1236, %v994, 0
        %1332 = vmatprep.subr.bf16.mxu0 0
        %1333 = vmatpush1.bf16.msra.mxu0 %v1330
        %1334 = vmatprep.subr.bf16.mxu0 0
        %1335 = vmatpush1.bf16.msra.mxu0 0
        %1336 = vmatprep.subr.bf16.mxu0 0
        %1337 = vmatpush1.bf16.msra.mxu0 0
        %1338 = vmatprep.subr.bf16.mxu0 0
        %1339 = vmatpush1.bf16.msra.mxu0 0
        %1340 = vmatprep.subr.bf16.mxu0 0
        %1341 = vmatpush1.bf16.msra.mxu0 0
        %1342 = vmatprep.subr.bf16.mxu0 0
        %1343 = vmatpush1.bf16.msra.mxu0 0
        %1344 = vmatprep.subr.bf16.mxu0 0
        %1345 = vmatpush1.bf16.msra.mxu0 0
        %1346 = vmatprep.subr.bf16.mxu0 0
        %1347 = vmatpush1.bf16.msra.mxu0 0
        %1348 = vmatprep.subr.bf16.mxu0 0
        %1349 = vmatpush1.bf16.msra.mxu0 0
        %1350 = vmatprep.subr.bf16.mxu0 0
        %1351 = vmatpush1.bf16.msra.mxu0 0
        %1352 = vmatprep.subr.bf16.mxu0 0
        %1353 = vmatpush1.bf16.msra.mxu0 0
        %1354 = vmatprep.subr.bf16.mxu0 0
        %1355 = vmatpush1.bf16.msra.mxu0 0
        %1356 = vmatprep.subr.bf16.mxu0 0
        %1357 = vmatpush1.bf16.msra.mxu0 0
        %1358 = vmatprep.subr.bf16.mxu0 0
        %1359 = vmatpush1.bf16.msra.mxu0 0
        %1360 = vmatprep.subr.bf16.mxu0 0
        %1361 = vmatpush1.bf16.msra.mxu0 0
        %1362 = vmatprep.subr.bf16.mxu0 0
        %1363 = vmatpush1.bf16.msra.mxu0 0
        %1364 = vmatprep.mubr.bf16.mxu0 0
        %1365 = vmatmul.mubr.bf16.gmra.mrb[0].mxu0 %v1327
        %v1366 = vpop.f32.mrb[0].mxu0
        %v1367 = vadd.f32 0.0, %v1366
        %v1368 = vpop.f32.mrb[0].mxu0
        %v1369 = vpop.f32.mrb[0].mxu0
        %v1370 = vpop.f32.mrb[0].mxu0
        %1371 = vdwg.mxu0
        %v1373 = vsel %vm996, %v1232, 0
        %v1376 = vsel %vm1236, %v995, 0
        %1378 = vmatprep.subr.bf16.mxu0 0
        %1379 = vmatpush1.bf16.msra.mxu0 %v1376
        %1380 = vmatprep.subr.bf16.mxu0 0
        %1381 = vmatpush1.bf16.msra.mxu0 0
        %1382 = vmatprep.subr.bf16.mxu0 0
        %1383 = vmatpush1.bf16.msra.mxu0 0
        %1384 = vmatprep.subr.bf16.mxu0 0
        %1385 = vmatpush1.bf16.msra.mxu0 0
        %1386 = vmatprep.subr.bf16.mxu0 0
        %1387 = vmatpush1.bf16.msra.mxu0 0
        %1388 = vmatprep.subr.bf16.mxu0 0
        %1389 = vmatpush1.bf16.msra.mxu0 0
        %1390 = vmatprep.subr.bf16.mxu0 0
        %1391 = vmatpush1.bf16.msra.mxu0 0
        %1392 = vmatprep.subr.bf16.mxu0 0
        %1393 = vmatpush1.bf16.msra.mxu0 0
        %1394 = vmatprep.subr.bf16.mxu0 0
        %1395 = vmatpush1.bf16.msra.mxu0 0
        %1396 = vmatprep.subr.bf16.mxu0 0
        %1397 = vmatpush1.bf16.msra.mxu0 0
        %1398 = vmatprep.subr.bf16.mxu0 0
        %1399 = vmatpush1.bf16.msra.mxu0 0
        %1400 = vmatprep.subr.bf16.mxu0 0
        %1401 = vmatpush1.bf16.msra.mxu0 0
        %1402 = vmatprep.subr.bf16.mxu0 0
        %1403 = vmatpush1.bf16.msra.mxu0 0
        %1404 = vmatprep.subr.bf16.mxu0 0
        %1405 = vmatpush1.bf16.msra.mxu0 0
        %1406 = vmatprep.subr.bf16.mxu0 0
        %1407 = vmatpush1.bf16.msra.mxu0 0
        %1408 = vmatprep.subr.bf16.mxu0 0
        %1409 = vmatpush1.bf16.msra.mxu0 0
        %1410 = vmatprep.mubr.bf16.mxu0 0
        %1411 = vmatmul.mubr.bf16.gmra.mrb[0].mxu0 %v1373
        %v1412 = vpop.f32.mrb[0].mxu0
        %v1413 = vadd.f32 0.0, %v1412
        %v1414 = vpop.f32.mrb[0].mxu0
        %v1415 = vpop.f32.mrb[0].mxu0
        %v1416 = vpop.f32.mrb[0].mxu0
        %1417 = vdwg.mxu0
        %v1418 = vcombine.low %v1275, %v1367
        %v1419 = vcombine.high %v1275, %v1367
        %v1421 = vunpack.c.l.s4 1983009808
        %v1422 = vunpack.c.0.s8 %v1421
        %v1423 = vlaneseq
        %v1424 = vshrl.u32 %v1423, 7
        %v1425 = vsub.s32 %v1422, %v1424
        %v1426 = vrot.slane %v1418, %v1425
        %v1428 = vunpack.c.l.s4 1983009808
        %v1429 = vunpack.c.0.s8 %v1428
        %v1430 = vlaneseq
        %v1431 = vshrl.u32 %v1430, 7
        %v1432 = vsub.s32 %v1429, %v1431
        %v1433 = vrot.slane %v1419, %v1432
        %v1434 = vcombine.low %v1321, %v1413
        %v1435 = vcombine.high %v1321, %v1413
        %v1437 = vunpack.c.l.s4 1983009808
        %v1438 = vunpack.c.0.s8 %v1437
        %v1439 = vlaneseq
        %v1440 = vshrl.u32 %v1439, 7
        %v1441 = vsub.s32 %v1438, %v1440
        %v1442 = vrot.slane %v1434, %v1441
        %v1444 = vunpack.c.l.s4 1983009808
        %v1445 = vunpack.c.0.s8 %v1444
        %v1446 = vlaneseq
        %v1447 = vshrl.u32 %v1446, 7
        %v1448 = vsub.s32 %v1445, %v1447
        %v1449 = vrot.slane %v1435, %v1448
        %v1450 = vcombine.low %v1426, %v1442
        %v1451 = vcombine.high %v1426, %v1442
        %v1453 = vunpack.c.l.s4 1934713408
        %v1454 = vunpack.c.0.s8 %v1453
        %v1455 = vlaneseq
        %v1456 = vshrl.u32 %v1455, 7
        %v1457 = vsub.s32 %v1454, %v1456
        %v1458 = vrot.slane %v1450, %v1457
        %v1460 = vunpack.c.l.s4 1934713408
        %v1461 = vunpack.c.0.s8 %v1460
        %v1462 = vlaneseq
        %v1463 = vshrl.u32 %v1462, 7
        %v1464 = vsub.s32 %v1461, %v1463
        %v1465 = vrot.slane %v1451, %v1464
        %v1466 = vcombine.low %v1433, %v1449
        %v1467 = vcombine.high %v1433, %v1449
        %v1469 = vunpack.c.l.s4 1934713408
        %v1470 = vunpack.c.0.s8 %v1469
        %v1471 = vlaneseq
        %v1472 = vshrl.u32 %v1471, 7
        %v1473 = vsub.s32 %v1470, %v1472
        %v1474 = vrot.slane %v1466, %v1473
        %v1476 = vunpack.c.l.s4 1934713408
        %v1477 = vunpack.c.0.s8 %v1476
        %v1478 = vlaneseq
        %v1479 = vshrl.u32 %v1478, 7
        %v1480 = vsub.s32 %v1477, %v1479
        %v1481 = vrot.slane %v1467, %v1480
        %v1482 = vcombine.high %v1458, 0.0
        %v1483 = vcombine.high %v1465, 0.0
        %v1484 = vcombine.high %v1474, 0.0
        %v1485 = vcombine.high %v1481, 0.0
        %v1486 = vcombine.low %v1458, %v1465
        %v1488 = vunpack.c.l.s4 1983009808
        %v1489 = vunpack.c.0.s8 %v1488
        %v1490 = vlaneseq
        %v1491 = vshrl.u32 %v1490, 7
        %v1492 = vsub.s32 %v1489, %v1491
        %v1493 = vrot.slane %v1486, %v1492
        %v1494 = vcombine.low %v1482, %v1483
        %v1496 = vunpack.c.l.s4 1983009808
        %v1497 = vunpack.c.0.s8 %v1496
        %v1498 = vlaneseq
        %v1499 = vshrl.u32 %v1498, 7
        %v1500 = vsub.s32 %v1497, %v1499
        %v1501 = vrot.slane %v1494, %v1500
        %v1502 = vcombine.low %v1474, %v1481
        %v1504 = vunpack.c.l.s4 1983009808
        %v1505 = vunpack.c.0.s8 %v1504
        %v1506 = vlaneseq
        %v1507 = vshrl.u32 %v1506, 7
        %v1508 = vsub.s32 %v1505, %v1507
        %v1509 = vrot.slane %v1502, %v1508
        %v1510 = vcombine.low %v1484, %v1485
        %v1512 = vunpack.c.l.s4 1983009808
        %v1513 = vunpack.c.0.s8 %v1512
        %v1514 = vlaneseq
        %v1515 = vshrl.u32 %v1514, 7
        %v1516 = vsub.s32 %v1513, %v1515
        %v1517 = vrot.slane %v1510, %v1516
        %v1518 = vcombine.low %v1493, %v1501
        %v1519 = vcombine.high %v1493, %v1501
        %v1521 = vunpack.c.l.s4 1934713408
        %v1522 = vunpack.c.0.s8 %v1521
        %v1523 = vlaneseq
        %v1524 = vshrl.u32 %v1523, 7
        %v1525 = vsub.s32 %v1522, %v1524
        %v1526 = vrot.slane %v1518, %v1525
        %v1528 = vunpack.c.l.s4 1934713408
        %v1529 = vunpack.c.0.s8 %v1528
        %v1530 = vlaneseq
        %v1531 = vshrl.u32 %v1530, 7
        %v1532 = vsub.s32 %v1529, %v1531
        %v1533 = vrot.slane %v1519, %v1532
        %v1534 = vcombine.low %v1509, %v1517
        %v1535 = vcombine.high %v1509, %v1517
        %v1537 = vunpack.c.l.s4 1934713408
        %v1538 = vunpack.c.0.s8 %v1537
        %v1539 = vlaneseq
        %v1540 = vshrl.u32 %v1539, 7
        %v1541 = vsub.s32 %v1538, %v1540
        %v1542 = vrot.slane %v1534, %v1541
        %v1544 = vunpack.c.l.s4 1934713408
        %v1545 = vunpack.c.0.s8 %v1544
        %v1546 = vlaneseq
        %v1547 = vshrl.u32 %v1546, 7
        %v1548 = vsub.s32 %v1545, %v1547
        %v1549 = vrot.slane %v1535, %v1548
        %v1550 = vcombine.low %v1526, %v1542
        %v1551 = vcombine.high %v1526, %v1542
        %v1552 = vcombine.low %v1533, %v1549
        %v1553 = vcombine.high %v1533, %v1549
        %1555 = vrot.lane.b32.xlu0 %v1551, 8
        %v1556 = vpop.permute.xlu0 %1555
        %1559 = vrot.lane.b32.xlu0 %v1552, 16
        %v1560 = vpop.permute.xlu0 %1559
        %1563 = vrot.lane.b32.xlu0 %v1553, 24
        %v1564 = vpop.permute.xlu0 %1563
        %v1566 = vsel %vm996, %v1550, %v1556
        %vm1567 = vcmask 130048
        %v1568 = vsel %vm1567, %v1566, %v1560
        %vm1569 = vcmask 195584
        %v1570 = vsel %vm1569, %v1568, %v1564
        %v1571 = vpack.c.bf16 %v1570, %v1570
        %v1572 = vld [vmem:[%s5] sm:$0xf]
        %v1573 = vld [vmem:[%s5 + $0x4] sm:$0xf]
        %v1574 = vld [vmem:[%s5 + $0x8] sm:$0xf]
        %v1575 = vld [vmem:[%s5 + $0xc] sm:$0xf]
        %v1576 = vld [vmem:[%s6] sm:$0x1]
        %v1578 = vlaneseq
        %v1579 = vshrl.u32 %v1578, 7
        %v1580 = vsub.s32 0, %v1579
        %v1581 = vrot.slane %v1576, %v1580
        %v1587 = vunpack.c.l.b16 %v1572
        %v1588 = vunpack.c.l.b16 %v1573
        %v1589 = vunpack.c.l.b16 %v1574
        %v1590 = vunpack.c.l.b16 %v1575
        %v1591 = vpack.c.b16 %v1588, %v1587
        %v1592 = vpack.c.b16 %v1590, %v1589
        %v1596 = vsel %vm441, %v1571, 0
        %1598 = vmatprep.subr.bf16.mxu0 0
        %1599 = vmatpush1.bf16.msra.mxu0 %v1591
        %1600 = vmatprep.subr.bf16.mxu0 0
        %1601 = vmatpush1.bf16.msra.mxu0 %v1592
        %1602 = vmatprep.subr.bf16.mxu0 0
        %1603 = vmatpush1.bf16.msra.mxu0 0
        %1604 = vmatprep.subr.bf16.mxu0 0
        %1605 = vmatpush1.bf16.msra.mxu0 0
        %1606 = vmatprep.subr.bf16.mxu0 0
        %1607 = vmatpush1.bf16.msra.mxu0 0
        %1608 = vmatprep.subr.bf16.mxu0 0
        %1609 = vmatpush1.bf16.msra.mxu0 0
        %1610 = vmatprep.subr.bf16.mxu0 0
        %1611 = vmatpush1.bf16.msra.mxu0 0
        %1612 = vmatprep.subr.bf16.mxu0 0
        %1613 = vmatpush1.bf16.msra.mxu0 0
        %1614 = vmatprep.subr.bf16.mxu0 0
        %1615 = vmatpush1.bf16.msra.mxu0 0
        %1616 = vmatprep.subr.bf16.mxu0 0
        %1617 = vmatpush1.bf16.msra.mxu0 0
        %1618 = vmatprep.subr.bf16.mxu0 0
        %1619 = vmatpush1.bf16.msra.mxu0 0
        %1620 = vmatprep.subr.bf16.mxu0 0
        %1621 = vmatpush1.bf16.msra.mxu0 0
        %1622 = vmatprep.subr.bf16.mxu0 0
        %1623 = vmatpush1.bf16.msra.mxu0 0
        %1624 = vmatprep.subr.bf16.mxu0 0
        %1625 = vmatpush1.bf16.msra.mxu0 0
        %1626 = vmatprep.subr.bf16.mxu0 0
        %1627 = vmatpush1.bf16.msra.mxu0 0
        %1628 = vmatprep.subr.bf16.mxu0 0
        %1629 = vmatpush1.bf16.msra.mxu0 0
        %1630 = vmatprep.mubr.bf16.mxu0 0
        %1631 = vmatmul.mubr.bf16.gmra.mrb[0].mxu0 %v1596
        %v1632 = vpop.f32.mrb[0].mxu0
        %v1633 = vadd.f32 %v1581, %v1632
        %v1634 = vpop.f32.mrb[0].mxu0
        %v1635 = vpop.f32.mrb[0].mxu0
        %v1636 = vpop.f32.mrb[0].mxu0
        %1637 = vdwg.mxu0
        %v1638 = vadd.f32 %v438, %v1633
        %v1639 = vld [vmem:[%s7] sm:$0x1]
        %v1640 = vld [vmem:[%s8] sm:$0x1]
        %v1641 = vsel %vm441, %v1638, 0.0
        %1642 = vadd.xlane.f32.xlu0 %v1641
        %v1643 = vpop.xlane.xlu0 %1642
        %v1644 = vmul.f32 %v1643, %v445
        %v1645 = vsub.f32 %v1638, %v1644
        %v1646 = vmul.f32 %v1645, %v1645
        %v1647 = vsel %vm441, %v1646, 0.0
        %1648 = vadd.xlane.f32.xlu0 %v1647
        %v1649 = vpop.xlane.xlu0 %1648
        %v1650 = vmul.f32 %v1649, %v445
        %v1651 = vadd.f32 %v1650, 1e-05
        %v1652 = vrsqrt.pop %v1651
        %v1653 = vmul.f32 %v1645, %v1652
        %v1655 = vlaneseq
        %v1656 = vshrl.u32 %v1655, 7
        %v1657 = vsub.s32 0, %v1656
        %v1658 = vrot.slane %v1639, %v1657
        %v1660 = vmul.f32 %v1653, %v1658
        %v1662 = vlaneseq
        %v1663 = vshrl.u32 %v1662, 7
        %v1664 = vsub.s32 0, %v1663
        %v1665 = vrot.slane %v1640, %v1664
        %v1667 = vadd.f32 %v1660, %v1665
        %v1668 = vpack.c.bf16 %v1667, %v1667
        %v1669 = vld [vmem:[%s9] sm:$0xf]
        %v1670 = vld [vmem:[%s9 + $0x4] sm:$0xf]
        %v1671 = vld [vmem:[%s9 + $0x8] sm:$0xf]
        %v1672 = vld [vmem:[%s9 + $0xc] sm:$0xf]
        %v1673 = vld [vmem:[%s10] sm:$0x1]
        %v1675 = vlaneseq
        %v1676 = vshrl.u32 %v1675, 7
        %v1677 = vsub.s32 0, %v1676
        %v1678 = vrot.slane %v1673, %v1677
        %v1684 = vunpack.c.l.b16 %v1669
        %v1685 = vunpack.c.l.b16 %v1670
        %v1686 = vunpack.c.l.b16 %v1671
        %v1687 = vunpack.c.l.b16 %v1672
        %v1688 = vpack.c.b16 %v1685, %v1684
        %v1689 = vpack.c.b16 %v1687, %v1686
        %v1693 = vsel %vm441, %v1668, 0
        %1695 = vmatprep.subr.bf16.mxu0 0
        %1696 = vmatpush1.bf16.msra.mxu0 %v1688
        %1697 = vmatprep.subr.bf16.mxu0 0
        %1698 = vmatpush1.bf16.msra.mxu0 %v1689
        %1699 = vmatprep.subr.bf16.mxu0 0
        %1700 = vmatpush1.bf16.msra.mxu0 0
        %1701 = vmatprep.subr.bf16.mxu0 0
        %1702 = vmatpush1.bf16.msra.mxu0 0
        %1703 = vmatprep.subr.bf16.mxu0 0
        %1704 = vmatpush1.bf16.msra.mxu0 0
        %1705 = vmatprep.subr.bf16.mxu0 0
        %1706 = vmatpush1.bf16.msra.mxu0 0
        %1707 = vmatprep.subr.bf16.mxu0 0
        %1708 = vmatpush1.bf16.msra.mxu0 0
        %1709 = vmatprep.subr.bf16.mxu0 0
        %1710 = vmatpush1.bf16.msra.mxu0 0
        %1711 = vmatprep.subr.bf16.mxu0 0
        %1712 = vmatpush1.bf16.msra.mxu0 0
        %1713 = vmatprep.subr.bf16.mxu0 0
        %1714 = vmatpush1.bf16.msra.mxu0 0
        %1715 = vmatprep.subr.bf16.mxu0 0
        %1716 = vmatpush1.bf16.msra.mxu0 0
        %1717 = vmatprep.subr.bf16.mxu0 0
        %1718 = vmatpush1.bf16.msra.mxu0 0
        %1719 = vmatprep.subr.bf16.mxu0 0
        %1720 = vmatpush1.bf16.msra.mxu0 0
        %1721 = vmatprep.subr.bf16.mxu0 0
        %1722 = vmatpush1.bf16.msra.mxu0 0
        %1723 = vmatprep.subr.bf16.mxu0 0
        %1724 = vmatpush1.bf16.msra.mxu0 0
        %1725 = vmatprep.subr.bf16.mxu0 0
        %1726 = vmatpush1.bf16.msra.mxu0 0
        %1727 = vmatprep.mubr.bf16.mxu0 0
        %1728 = vmatmul.mubr.bf16.gmra.mrb[0].mxu0 %v1693
        %v1729 = vpop.f32.mrb[0].mxu0
        %v1730 = vadd.f32 %v1678, %v1729
        %v1731 = vpop.f32.mrb[0].mxu0
        %v1732 = vpop.f32.mrb[0].mxu0
        %v1733 = vpop.f32.mrb[0].mxu0
        %1734 = vdwg.mxu0
        %v1735 = vmul.f32 %v1730, 1.702
        %v1736 = vxor.u32 %v1735, 2147483648
        %v1737 = vmul.f32 %v1736, 1.442695
        %v1738 = vpow.pop %v1737
        %v1739 = vadd.f32 %v1738, 1.0
        %v1740 = vrcp.pop %v1739
        %v1741 = vmul.f32 1.0, %v1740
        %v1742 = vmul.f32 %v1730, %v1741
        %v1743 = vpack.c.bf16 %v1742, %v1742
        %v1744 = vld [vmem:[%s11] sm:$0xf]
        %v1745 = vld [vmem:[%s11 + $0x4] sm:$0xf]
        %v1746 = vld [vmem:[%s11 + $0x8] sm:$0xf]
        %v1747 = vld [vmem:[%s11 + $0xc] sm:$0xf]
        %v1748 = vld [vmem:[%s11 + $0x10] sm:$0xf]
        %v1749 = vld [vmem:[%s11 + $0x14] sm:$0xf]
        %v1750 = vld [vmem:[%s11 + $0x18] sm:$0xf]
        %v1751 = vld [vmem:[%s11 + $0x1c] sm:$0xf]
        %v1752 = vld [vmem:[%s11 + $0x20] sm:$0xf]
        %v1753 = vld [vmem:[%s11 + $0x24] sm:$0xf]
        %v1754 = vld [vmem:[%s11 + $0x28] sm:$0xf]
        %v1755 = vld [vmem:[%s11 + $0x2c] sm:$0xf]
        %v1756 = vld [vmem:[%s11 + $0x30] sm:$0xf]
        %v1757 = vld [vmem:[%s11 + $0x34] sm:$0xf]
        %v1758 = vld [vmem:[%s11 + $0x38] sm:$0xf]
        %v1759 = vld [vmem:[%s11 + $0x3c] sm:$0xf]
        %v1760 = vld [vmem:[%s12] sm:$0x1]
        %v1762 = vlaneseq
        %v1763 = vshrl.u32 %v1762, 7
        %v1764 = vsub.s32 0, %v1763
        %v1765 = vrot.slane %v1760, %v1764
        %v1783 = vunpack.c.l.b16 %v1744
        %v1784 = vunpack.c.l.b16 %v1745
        %v1785 = vunpack.c.l.b16 %v1746
        %v1786 = vunpack.c.l.b16 %v1747
        %v1787 = vunpack.c.l.b16 %v1748
        %v1788 = vunpack.c.l.b16 %v1749
        %v1789 = vunpack.c.l.b16 %v1750
        %v1790 = vunpack.c.l.b16 %v1751
        %v1791 = vunpack.c.l.b16 %v1752
        %v1792 = vunpack.c.l.b16 %v1753
        %v1793 = vunpack.c.l.b16 %v1754
        %v1794 = vunpack.c.l.b16 %v1755
        %v1795 = vunpack.c.l.b16 %v1756
        %v1796 = vunpack.c.l.b16 %v1757
        %v1797 = vunpack.c.l.b16 %v1758
        %v1798 = vunpack.c.l.b16 %v1759
        %v1799 = vpack.c.b16 %v1784, %v1783
        %v1800 = vpack.c.b16 %v1786, %v1785
        %v1801 = vpack.c.b16 %v1788, %v1787
        %v1802 = vpack.c.b16 %v1790, %v1789
        %v1803 = vpack.c.b16 %v1792, %v1791
        %v1804 = vpack.c.b16 %v1794, %v1793
        %v1805 = vpack.c.b16 %v1796, %v1795
        %v1806 = vpack.c.b16 %v1798, %v1797
        %1815 = vmatprep.subr.bf16.mxu0 0
        %1816 = vmatpush1.bf16.msra.mxu0 %v1799
        %1817 = vmatprep.subr.bf16.mxu0 0
        %1818 = vmatpush1.bf16.msra.mxu0 %v1800
        %1819 = vmatprep.subr.bf16.mxu0 0
        %1820 = vmatpush1.bf16.msra.mxu0 %v1801
        %1821 = vmatprep.subr.bf16.mxu0 0
        %1822 = vmatpush1.bf16.msra.mxu0 %v1802
        %1823 = vmatprep.subr.bf16.mxu0 0
        %1824 = vmatpush1.bf16.msra.mxu0 %v1803
        %1825 = vmatprep.subr.bf16.mxu0 0
        %1826 = vmatpush1.bf16.msra.mxu0 %v1804
        %1827 = vmatprep.subr.bf16.mxu0 0
        %1828 = vmatpush1.bf16.msra.mxu0 %v1805
        %1829 = vmatprep.subr.bf16.mxu0 0
        %1830 = vmatpush1.bf16.msra.mxu0 %v1806
        %1831 = vmatprep.subr.bf16.mxu0 0
        %1832 = vmatpush1.bf16.msra.mxu0 0
        %1833 = vmatprep.subr.bf16.mxu0 0
        %1834 = vmatpush1.bf16.msra.mxu0 0
        %1835 = vmatprep.subr.bf16.mxu0 0
        %1836 = vmatpush1.bf16.msra.mxu0 0
        %1837 = vmatprep.subr.bf16.mxu0 0
        %1838 = vmatpush1.bf16.msra.mxu0 0
        %1839 = vmatprep.subr.bf16.mxu0 0
        %1840 = vmatpush1.bf16.msra.mxu0 0
        %1841 = vmatprep.subr.bf16.mxu0 0
        %1842 = vmatpush1.bf16.msra.mxu0 0
        %1843 = vmatprep.subr.bf16.mxu0 0
        %1844 = vmatpush1.bf16.msra.mxu0 0
        %1845 = vmatprep.subr.bf16.mxu0 0
        %1846 = vmatpush1.bf16.msra.mxu0 0
        %1847 = vmatprep.mubr.bf16.mxu0 0
        %1848 = vmatmul.mubr.bf16.gmra.mrb[0].mxu0 %v1743
        %v1849 = vpop.f32.mrb[0].mxu0
        %v1850 = vadd.f32 %v1765, %v1849
        %v1851 = vpop.f32.mrb[0].mxu0
        %v1852 = vpop.f32.mrb[0].mxu0
        %v1853 = vpop.f32.mrb[0].mxu0
        %1854 = vdwg.mxu0
        %v1855 = vadd.f32 %v1638, %v1850
        %v1856 = vpack.c.bf16 %v1855, %v1855
        %vm1857 = vcmask 257024
        %1858 = vst.msk [vmem:[%s431] sm:$0xf] %vm1857, %v1856
        %s1859 = sand.u32 %s313, 1
        %s1860 = scalar_lea.sflag [#allocation4], %s1859
        %s1861 = sand.u32 %s313, 1
        %s1862 = smul.addr %s1861, 4
        %s1863 = scalar_lea.vmem [#allocation3], %s1862
        // Predicated region
        $region73: #{tpu_custom_call.1} parent=71 // pred_check
          %p1864 = pneg %p323
        $region74: #{tpu_custom_call.1} parent=71 // pred_check_branch
          %1866 = sbr.rel (%p1864) target = $region76
        $region75: #{tpu_custom_call.1} parent=71 // pred_region
          %s1868 = ssub.s32 64, 64
          %1869 = vsyncadd %s1860, %s1868
          %s1870 = smul.addr %s27, 64
          %s1871 = scalar_lea.hbm %s13, %s1870
          %s1873 = sshll.u32 %s1863, 4
          %s1874 = int_to_ptr.vmem [resolvable:$true] %s1873
          %1876 = dma.vmem_to_hbm [thread:$0]  %s1874, 64, %s1871, %s1860
        $region76: #{tpu_custom_call.1} parent=71 // pred_fallthru
          _
      $region72: #{tpu_custom_call.1} parent=5 // pred_fallthru
        _
      %p1877 = scmp.le.s32.totalorder 2, %s22
      // Predicated region
      $region77: #{tpu_custom_call.1} parent=5 // pred_check
        %p1878 = pneg %p1877
      $region78: #{tpu_custom_call.1} parent=5 // pred_check_branch
        %1880 = sbr.rel (%p1878) target = $region80
      $region79: #{tpu_custom_call.1} parent=5 // pred_region
        %s1881 = ssub.s32 %s22, 2
        // Predicated region
        $region81: #{tpu_custom_call.1} parent=79 // pred_check
          %p1882 = pneg %p329
        $region82: #{tpu_custom_call.1} parent=79 // pred_check_branch
          %1884 = sbr.rel (%p1882) target = $region84
        $region83: #{tpu_custom_call.1} parent=79 // pred_region
          %s1885 = sand.u32 %s314, 1
          %s1886 = scalar_lea.sflag [#allocation4], %s1885
          %s1887 = sand.u32 %s314, 1
          %s1888 = smul.addr %s1887, 4
          %s1889 = scalar_lea.vmem [#allocation3], %s1888
          %1890 = dma.done %s1886, 64
        $region84: #{tpu_custom_call.1} parent=79 // pred_fallthru
          _
      $region80: #{tpu_custom_call.1} parent=5 // pred_fallthru
        _
    $region6: #{tpu_custom_call.1} parent=1 // loop_footer
      %s26 = sadd.s32 1, %s22
    $region7: #{tpu_custom_call.1} parent=1 // loop_footer_branch
      %21 = sbr.rel target = $region3
    $region8: #{tpu_custom_call.1} parent=1 // loop_exit
      _
    %1891 = vsyncpa [#allocation4], 1
    %s1892 = scalar_lea.sflag [#allocation4], 1
    %1893 = vsyncpa %s1892, 1

</llo_original>
